<compile_context>
chip_gen: v7x
topology: tpu7x:2x2x1
jax: 0.10.0
libtpu: 0.0.40
codegen_flags: <defaults>
</compile_context>

<pallas_src>
import functools

import jax
import jax.numpy as jnp
from jax import lax
from jax.experimental import pallas as pl
from jax.experimental.pallas import tpu as pltpu

# Match kernel / reference matmul numerics (full f32) so the 1e-5 check is meaningful.
jax.config.update("jax_default_matmul_precision", "highest")

N_HEADS = 4            # no_of_action_types
LANE = 128             # lane-dense output width
PAD_A = LANE // N_HEADS  # padded action columns per head (32)
TILE_B = 8             # batch tile (sublane-aligned)
NEG_INF = -1e30        # pad-column logit bias -> softmax prob underflows to 0


def actor_kernel(x_ref, w1_ref, w2_ref, b12_ref, w3f_ref, b3f_ref, out_ref):
    # fc1 + relu
    x = x_ref[...]
    h1 = jnp.dot(x, w1_ref[...], preferred_element_type=jnp.float32,
                 precision=lax.Precision.HIGHEST) + b12_ref[0:1, :]
    h1 = jnp.maximum(h1, 0.0)
    # fc2 + relu
    h2 = jnp.dot(h1, w2_ref[...], preferred_element_type=jnp.float32,
                 precision=lax.Precision.HIGHEST) + b12_ref[1:2, :]
    h2 = jnp.maximum(h2, 0.0)
    # fused heads: one MXU pass -> (TB, 128) logits (pad columns biased to -1e30)
    logits = jnp.dot(h2, w3f_ref[...], preferred_element_type=jnp.float32,
                     precision=lax.Precision.HIGHEST) + b3f_ref[...]
    # vectorized per-head softmax: one max / exp / sum / divide over the
    # (TB, N_HEADS, PAD_A) view, then one unmasked 128-lane-dense store.
    tb = logits.shape[0]
    lg = logits.reshape(tb, N_HEADS, PAD_A)
    m = jnp.max(lg, axis=-1, keepdims=True)
    e = jnp.exp(lg - m)
    s = jnp.sum(e, axis=-1, keepdims=True)
    p = e / s  # exact divide (approx vrcp was the source of the 1e-5 mismatch)
    out_ref[...] = p.reshape(tb, N_HEADS * PAD_A)
    # TODO(synk): at production-scale H / batch, cast matmul operands to bf16
    # (keep f32 accumulate + f32 elementwise) and size tiles toward the MXU
    # width (256 on v6e/v7x, 128 on v5e).


def prepare_params(w1, b1, w2, b2, w3, b3):
    """One-time fold/pad of the raw parameters for the kernel.

    Call this once at init (NOT per forward step): it folds the 4 head weights
    into one lane-dense (H, 128) matrix, pads the extra columns with zero
    weights / -1e30 bias, and packs b1,b2 into a single (2, H) buffer.
    """
    H = w1.shape[1]
    A = w3.shape[-1]
    assert N_HEADS * A <= LANE, "a_size too large for a single 128-lane head block"
    b12 = jnp.concatenate([b1.reshape(1, H), b2.reshape(1, H)], axis=0)  # (2, H)
    w3f = jnp.zeros((H, N_HEADS, PAD_A), jnp.float32)
    w3f = w3f.at[:, :, :A].set(jnp.transpose(w3, (1, 0, 2)))             # cols = [head0|head1|...]
    w3f = w3f.reshape(H, N_HEADS * PAD_A)                                # (H, 128)
    b3f = jnp.full((N_HEADS, PAD_A), NEG_INF, jnp.float32)
    b3f = b3f.at[:, :A].set(b3.reshape(N_HEADS, A)).reshape(1, N_HEADS * PAD_A)  # (1, 128)
    return w1, w2, b12, w3f, b3f
    # TODO(synk): could further pack all params into one contiguous 128-lane
    # aligned VMEM buffer to collapse the remaining DMA descriptors.


def actor_forward(x, params, *, a_size):
    """x: (B, s_size); params from prepare_params; returns (B, N_HEADS, a_size)
    where [:, k, :] is head k's softmax (same semantics as the PyTorch list)."""
    w1, w2, b12, w3f, b3f = params
    B, S = x.shape
    H = w1.shape[1]

    B_pad = pl.cdiv(B, TILE_B) * TILE_B
    if B_pad != B:
        x = jnp.pad(x, ((0, B_pad - B), (0, 0)))

    out = pl.pallas_call(
        actor_kernel,
        out_shape=jax.ShapeDtypeStruct((B_pad, N_HEADS * PAD_A), jnp.float32),
        grid=(B_pad // TILE_B,),
        in_specs=[
            pl.BlockSpec((TILE_B, S), lambda i: (i, 0)),          # x: tiled over batch
            pl.BlockSpec((S, H), lambda i: (0, 0)),               # w1: VMEM-resident
            pl.BlockSpec((H, H), lambda i: (0, 0)),               # w2: VMEM-resident
            pl.BlockSpec((2, H), lambda i: (0, 0)),               # [b1; b2]
            pl.BlockSpec((H, N_HEADS * PAD_A), lambda i: (0, 0)),  # fused head weights
            pl.BlockSpec((1, N_HEADS * PAD_A), lambda i: (0, 0)),  # fused head bias
        ],
        out_specs=pl.BlockSpec((TILE_B, N_HEADS * PAD_A), lambda i: (i, 0)),
        compiler_params=pltpu.CompilerParams(
            dimension_semantics=("parallel",)),                   # shard batch across TCs (v7x)
    )(x, w1, w2, b12, w3f, b3f)

    # Cheap view back to per-head probabilities (no transpose in the hot path).
    return out[:B].reshape(B, N_HEADS, PAD_A)[:, :, :a_size]


def init_params(key, s_size, h_size, a_size):
    """Deterministic init mimicking PyTorch Linear (uniform +/- 1/sqrt(fan_in))."""
    ks = jax.random.split(key, 6)

    def u(k, shape, fan_in):
        bound = 1.0 / jnp.sqrt(jnp.float32(fan_in))
        return jax.random.uniform(k, shape, jnp.float32, -bound, bound)

    w1 = u(ks[0], (s_size, h_size), s_size)
    b1 = u(ks[1], (1, h_size), s_size)
    w2 = u(ks[2], (h_size, h_size), h_size)
    b2 = u(ks[3], (1, h_size), h_size)
    w3 = u(ks[4], (N_HEADS, h_size, a_size), h_size)
    b3 = u(ks[5], (N_HEADS, 1, a_size), h_size)
    return w1, b1, w2, b2, w3, b3


def actor_reference(x, w1, b1, w2, b2, w3, b3):
    h1 = jax.nn.relu(x @ w1 + b1)
    h2 = jax.nn.relu(h1 @ w2 + b2)
    return jnp.stack(
        [jax.nn.softmax(h2 @ w3[k] + b3[k], axis=-1) for k in range(N_HEADS)],
        axis=1)  # (B, N_HEADS, A)


if __name__ == "__main__":
    batch, s_size, h_size, a_size = 8, 16, 32, 8

    key = jax.random.PRNGKey(0)
    kx, kp = jax.random.split(key)
    x = jax.random.normal(kx, (batch, s_size), jnp.float32)
    raw = init_params(kp, s_size, h_size, a_size)

    # Fold / pad the parameters ONCE (not per step).
    params = prepare_params(*raw)

    fwd = jax.jit(functools.partial(actor_forward, a_size=a_size))
    out = jax.block_until_ready(fwd(x, params))

    ref = actor_reference(x, *raw)
    assert out.shape == (batch, N_HEADS, a_size)
    assert jnp.allclose(out, ref, atol=1e-5, rtol=1e-5), "mismatch vs reference"
    # each head's rows sum to 1 (softmax over the action dim; pad lanes hold 0)
    assert jnp.allclose(out.sum(axis=-1), 1.0, atol=1e-5)

    print("KERNEL_OK")
</pallas_src>

<mosaic_0001>
module attributes {stable_mosaic.version = 11 : i64} {
  func.func @actor_kernel(%arg0: i32, %arg1: memref<8x16xf32, #tpu.memory_space<vmem>>, %arg2: memref<16x32xf32, #tpu.memory_space<vmem>>, %arg3: memref<32x32xf32, #tpu.memory_space<vmem>>, %arg4: memref<2x32xf32, #tpu.memory_space<vmem>>, %arg5: memref<32x128xf32, #tpu.memory_space<vmem>>, %arg6: memref<1x128xf32, #tpu.memory_space<vmem>>, %arg7: memref<8x128xf32, #tpu.memory_space<vmem>>) attributes {dimension_semantics = [#tpu.dimension_semantics<parallel>], iteration_bounds = array<i64: 1>, scalar_prefetch = 0 : i64, scratch_operands = 0 : i64, tpu.core_type = #tpu.core_type<tc>, window_params = [{transform_indices = @transform_0, window_bounds = array<i64: 8, 16>}, {pipeline_mode = #tpu.pipeline_mode<synchronous>, transform_indices = @transform_1, window_bounds = array<i64: 16, 32>}, {pipeline_mode = #tpu.pipeline_mode<synchronous>, transform_indices = @transform_2, window_bounds = array<i64: 32, 32>}, {pipeline_mode = #tpu.pipeline_mode<synchronous>, transform_indices = @transform_3, window_bounds = array<i64: 2, 32>}, {pipeline_mode = #tpu.pipeline_mode<synchronous>, transform_indices = @transform_4, window_bounds = array<i64: 32, 128>}, {pipeline_mode = #tpu.pipeline_mode<synchronous>, transform_indices = @transform_5, window_bounds = array<i64: 1, 128>}, {transform_indices = @transform_6, window_bounds = array<i64: 8, 128>}]} {
    %c0 = arith.constant 0 : index
    %c0_0 = arith.constant 0 : index
    %0 = vector.load %arg1[%c0, %c0_0] : memref<8x16xf32, #tpu.memory_space<vmem>>, vector<8x16xf32>
    %c0_1 = arith.constant 0 : index
    %c0_2 = arith.constant 0 : index
    %1 = vector.load %arg2[%c0_1, %c0_2] : memref<16x32xf32, #tpu.memory_space<vmem>>, vector<16x32xf32>
    %cst = arith.constant dense<0.000000e+00> : vector<8x32xf32>
    %2 = tpu.matmul %0, %1, %cst {dimension_numbers = #tpu.dot_dimension_numbers<[1], [0], [0], [1], [0, 0, 1, 1], [], []>, precision = #tpu.contract_precision<fp32>} : vector<8x16xf32>, vector<16x32xf32>, vector<8x32xf32> -> vector<8x32xf32>
    %c0_3 = arith.constant 0 : index
    %c0_4 = arith.constant 0 : index
    %3 = vector.load %arg4[%c0_3, %c0_4] : memref<2x32xf32, #tpu.memory_space<vmem>>, vector<1x32xf32>
    %4 = vector.broadcast %3 : vector<1x32xf32> to vector<8x32xf32>
    %5 = arith.addf %2, %4 : vector<8x32xf32>
    %cst_5 = arith.constant 0.000000e+00 : f32
    %6 = vector.broadcast %cst_5 : f32 to vector<8x32xf32>
    %7 = arith.maximumf %5, %6 : vector<8x32xf32>
    %c0_6 = arith.constant 0 : index
    %c0_7 = arith.constant 0 : index
    %8 = vector.load %arg3[%c0_6, %c0_7] : memref<32x32xf32, #tpu.memory_space<vmem>>, vector<32x32xf32>
    %cst_8 = arith.constant dense<0.000000e+00> : vector<8x32xf32>
    %9 = tpu.matmul %7, %8, %cst_8 {dimension_numbers = #tpu.dot_dimension_numbers<[1], [0], [0], [1], [0, 0, 1, 1], [], []>, precision = #tpu.contract_precision<fp32>} : vector<8x32xf32>, vector<32x32xf32>, vector<8x32xf32> -> vector<8x32xf32>
    %c1 = arith.constant 1 : index
    %c0_9 = arith.constant 0 : index
    %10 = vector.load %arg4[%c1, %c0_9] : memref<2x32xf32, #tpu.memory_space<vmem>>, vector<1x32xf32>
    %11 = vector.broadcast %10 : vector<1x32xf32> to vector<8x32xf32>
    %12 = arith.addf %9, %11 : vector<8x32xf32>
    %cst_10 = arith.constant 0.000000e+00 : f32
    %13 = vector.broadcast %cst_10 : f32 to vector<8x32xf32>
    %14 = arith.maximumf %12, %13 : vector<8x32xf32>
    %c0_11 = arith.constant 0 : index
    %c0_12 = arith.constant 0 : index
    %15 = vector.load %arg5[%c0_11, %c0_12] : memref<32x128xf32, #tpu.memory_space<vmem>>, vector<32x128xf32>
    %cst_13 = arith.constant dense<0.000000e+00> : vector<8x128xf32>
    %16 = tpu.matmul %14, %15, %cst_13 {dimension_numbers = #tpu.dot_dimension_numbers<[1], [0], [0], [1], [0, 0, 1, 1], [], []>, precision = #tpu.contract_precision<fp32>} : vector<8x32xf32>, vector<32x128xf32>, vector<8x128xf32> -> vector<8x128xf32>
    %c0_14 = arith.constant 0 : index
    %c0_15 = arith.constant 0 : index
    %17 = vector.load %arg6[%c0_14, %c0_15] : memref<1x128xf32, #tpu.memory_space<vmem>>, vector<1x128xf32>
    %18 = vector.broadcast %17 : vector<1x128xf32> to vector<8x128xf32>
    %19 = arith.addf %16, %18 : vector<8x128xf32>
    %20 = vector.shape_cast %19 : vector<8x128xf32> to vector<8x4x32xf32>
    %cst_16 = arith.constant dense<0xFF800000> : vector<8x4xf32>
    %21 = vector.multi_reduction <maximumf>, %20, %cst_16 [2] : vector<8x4x32xf32> to vector<8x4xf32>
    %22 = vector.shape_cast %21 : vector<8x4xf32> to vector<8x4x1xf32>
    %23 = vector.broadcast %22 : vector<8x4x1xf32> to vector<8x4x32xf32>
    %24 = arith.subf %20, %23 : vector<8x4x32xf32>
    %25 = math.exp %24 : vector<8x4x32xf32>
    %cst_17 = arith.constant dense<0.000000e+00> : vector<8x4xf32>
    %26 = vector.multi_reduction <add>, %25, %cst_17 [2] : vector<8x4x32xf32> to vector<8x4xf32>
    %27 = vector.shape_cast %26 : vector<8x4xf32> to vector<8x4x1xf32>
    %28 = vector.broadcast %27 : vector<8x4x1xf32> to vector<8x4x32xf32>
    %29 = arith.divf %25, %28 : vector<8x4x32xf32>
    %30 = vector.shape_cast %29 : vector<8x4x32xf32> to vector<8x128xf32>
    %c0_18 = arith.constant 0 : index
    %c0_19 = arith.constant 0 : index
    %31 = vector.load %arg7[%c0_18, %c0_19] : memref<8x128xf32, #tpu.memory_space<vmem>>, vector<8x128xf32>
    tpu.vector_store %arg7[%c0_18, %c0_19], %30 {strides = array<i32>} : memref<8x128xf32, #tpu.memory_space<vmem>>, vector<8x128xf32>,
    return
  }
  func.func @transform_0(%arg0: i32) -> (i32, i32) {
    %c0_i32 = arith.constant 0 : i32
    %c0_i32_0 = arith.constant 0 : i32
    return %arg0, %c0_i32 : i32, i32
  }
  func.func @transform_1(%arg0: i32) -> (i32, i32) {
    %c0_i32 = arith.constant 0 : i32
    %c0_i32_0 = arith.constant 0 : i32
    %c0_i32_1 = arith.constant 0 : i32
    return %c0_i32, %c0_i32_0 : i32, i32
  }
  func.func @transform_2(%arg0: i32) -> (i32, i32) {
    %c0_i32 = arith.constant 0 : i32
    %c0_i32_0 = arith.constant 0 : i32
    %c0_i32_1 = arith.constant 0 : i32
    return %c0_i32, %c0_i32_0 : i32, i32
  }
  func.func @transform_3(%arg0: i32) -> (i32, i32) {
    %c0_i32 = arith.constant 0 : i32
    %c0_i32_0 = arith.constant 0 : i32
    %c0_i32_1 = arith.constant 0 : i32
    return %c0_i32, %c0_i32_0 : i32, i32
  }
  func.func @transform_4(%arg0: i32) -> (i32, i32) {
    %c0_i32 = arith.constant 0 : i32
    %c0_i32_0 = arith.constant 0 : i32
    %c0_i32_1 = arith.constant 0 : i32
    return %c0_i32, %c0_i32_0 : i32, i32
  }
  func.func @transform_5(%arg0: i32) -> (i32, i32) {
    %c0_i32 = arith.constant 0 : i32
    %c0_i32_0 = arith.constant 0 : i32
    %c0_i32_1 = arith.constant 0 : i32
    return %c0_i32, %c0_i32_0 : i32, i32
  }
  func.func @transform_6(%arg0: i32) -> (i32, i32) {
    %c0_i32 = arith.constant 0 : i32
    %c0_i32_0 = arith.constant 0 : i32
    return %arg0, %c0_i32 : i32, i32
  }
}

</mosaic_0001>

<llo_original>
// kernel: actor_forward.1
$region0: #{actor_forward.1}
  #allocation0 [shape = 'u32[]', space=smem, size = 0x4, offset = 0x4, fixed_abs, tag = 'smem constant byte address 0x4 - core index']
  #allocation1 [shape = 'u32[144,128]{1,0:T(1,128)}', space=vmem, size = 0x12000, scoped, tag = 'internal scratch']
  %s0 = inlined_call_operand.hbm [shape: f32[8,16], index: 0, kind: input, shape index: {}]
  %s1 = inlined_call_operand.hbm [shape: f32[16,32], index: 1, kind: input, shape index: {}]
  %s2 = inlined_call_operand.hbm [shape: f32[32,32], index: 2, kind: input, shape index: {}]
  %s3 = inlined_call_operand.vmem [shape: f32[2,32], index: 3, kind: input, shape index: {}]
  %s4 = inlined_call_operand.hbm [shape: f32[32,128], index: 4, kind: input, shape index: {}]
  %s5 = inlined_call_operand.vmem [shape: f32[1,128], index: 5, kind: input, shape index: {}]
  %s6 = inlined_call_operand.vmem [shape: f32[8,128], index: 6, kind: output, shape index: {}]
  %s7 = sld [smem:[#allocation0]]
  $region50: #{actor_forward.1} parent=0
    _
  %s9 = ssub.s32 1, %s7
  %s10 = scalar_select 0, %s9, %s7
  $region1: #{actor_forward.1} parent=0
    #allocation2 [shape = 'u8[4096]{0}', space=vmem, size = 0x1000, scoped, tag = 'input window, operand 0, single buffered']
    #allocation3 [shape = 's32[1]{0}', space=sflag, size = 0x4, scoped, tag = 'scoped memory for actor_forward.1']
    #allocation4 [shape = 'u8[8192]{0}', space=vmem, size = 0x2000, scoped, tag = 'input window, operand 1, single buffered']
    #allocation5 [shape = 's32[1]{0}', space=sflag, size = 0x4, scoped, tag = 'scoped memory for actor_forward.1']
    #allocation6 [shape = 'u8[16384]{0}', space=vmem, size = 0x4000, scoped, tag = 'input window, operand 2, single buffered']
    #allocation7 [shape = 'u8[16384]{0}', space=vmem, size = 0x4000, scoped, tag = 'input window, operand 4, single buffered']
    #allocation8 [shape = 's32[1]{0}', space=sflag, size = 0x4, scoped, tag = 'scoped memory for actor_forward.1']
    %11 = vsyncpa [#allocation3], 0
    %12 = vsyncpa [#allocation5], 0
    %13 = vsyncpa [#allocation8], 0
    // Predicated region
    $region2: #{actor_forward.1} parent=1 // pred_check
      _
    $region3: #{actor_forward.1} parent=1 // pred_check_branch
      %15 = sbr.rel (0) target = $region5
    $region4: #{actor_forward.1} parent=1 // pred_region
      %s17 = ssub.s32 128, 128
      %18 = vsyncadd [#allocation3], %s17
      %s20 = sshll.u32 [#allocation2], 4
      %s21 = int_to_ptr.vmem [resolvable:$true] %s20
      %23 = dma.hbm_to_vmem [thread:$0]  %s0, 128, %s21, [#allocation3]
    $region5: #{actor_forward.1} parent=1 // pred_fallthru
      _
    // Predicated region
    $region6: #{actor_forward.1} parent=1 // pred_check
      _
    $region7: #{actor_forward.1} parent=1 // pred_check_branch
      %25 = sbr.rel (0) target = $region9
    $region8: #{actor_forward.1} parent=1 // pred_region
      %s27 = ssub.s32 256, 256
      %28 = vsyncadd [#allocation5], %s27
      %s29 = sshll.u32 [#allocation4], 4
      %s30 = int_to_ptr.vmem [resolvable:$true] %s29
      %35 = dma.hbm_to_vmem [thread:$0]  %s1, 256, %s30, [#allocation5], 128, 128, 8
    $region9: #{actor_forward.1} parent=1 // pred_fallthru
      _
    // Predicated region
    $region10: #{actor_forward.1} parent=1 // pred_check
      _
    $region11: #{actor_forward.1} parent=1 // pred_check_branch
      %37 = sbr.rel (0) target = $region13
    $region12: #{actor_forward.1} parent=1 // pred_region
      %s39 = ssub.s32 512, 512
      %40 = vsyncadd [#allocation5], %s39
      %s41 = sshll.u32 [#allocation6], 4
      %s42 = int_to_ptr.vmem [resolvable:$true] %s41
      %47 = dma.hbm_to_vmem [thread:$0]  %s2, 512, %s42, [#allocation5], 128, 128, 8
    $region13: #{actor_forward.1} parent=1 // pred_fallthru
      _
    // Predicated region
    $region14: #{actor_forward.1} parent=1 // pred_check
      _
    $region15: #{actor_forward.1} parent=1 // pred_check_branch
      %49 = sbr.rel (0) target = $region17
    $region16: #{actor_forward.1} parent=1 // pred_region
      _
    $region17: #{actor_forward.1} parent=1 // pred_fallthru
      _
    // Predicated region
    $region18: #{actor_forward.1} parent=1 // pred_check
      _
    $region19: #{actor_forward.1} parent=1 // pred_check_branch
      %51 = sbr.rel (0) target = $region21
    $region20: #{actor_forward.1} parent=1 // pred_region
      %s53 = ssub.s32 512, 512
      %54 = vsyncadd [#allocation8], %s53
      %s55 = sshll.u32 [#allocation7], 4
      %s56 = int_to_ptr.vmem [resolvable:$true] %s55
      %61 = dma.hbm_to_vmem [thread:$0]  %s4, 512, %s56, [#allocation8], 128, 128, 8
    $region21: #{actor_forward.1} parent=1 // pred_fallthru
      _
    // Predicated region
    $region22: #{actor_forward.1} parent=1 // pred_check
      _
    $region23: #{actor_forward.1} parent=1 // pred_check_branch
      %63 = sbr.rel (0) target = $region25
    $region24: #{actor_forward.1} parent=1 // pred_region
      _
    $region25: #{actor_forward.1} parent=1 // pred_fallthru
      _
    // Predicated region
    $region26: #{actor_forward.1} parent=1 // pred_check
      _
    $region27: #{actor_forward.1} parent=1 // pred_check_branch
      %65 = sbr.rel (0) target = $region29
    $region28: #{actor_forward.1} parent=1 // pred_region
      %66 = dma.done [#allocation3], 128
    $region29: #{actor_forward.1} parent=1 // pred_fallthru
      _
    // Predicated region
    $region30: #{actor_forward.1} parent=1 // pred_check
      _
    $region31: #{actor_forward.1} parent=1 // pred_check_branch
      %68 = sbr.rel (0) target = $region33
    $region32: #{actor_forward.1} parent=1 // pred_region
      %69 = dma.done [#allocation5], 256
    $region33: #{actor_forward.1} parent=1 // pred_fallthru
      _
    // Predicated region
    $region34: #{actor_forward.1} parent=1 // pred_check
      _
    $region35: #{actor_forward.1} parent=1 // pred_check_branch
      %71 = sbr.rel (0) target = $region37
    $region36: #{actor_forward.1} parent=1 // pred_region
      %72 = dma.done [#allocation5], 512
    $region37: #{actor_forward.1} parent=1 // pred_fallthru
      _
    // Predicated region
    $region38: #{actor_forward.1} parent=1 // pred_check
      _
    $region39: #{actor_forward.1} parent=1 // pred_check_branch
      %74 = sbr.rel (0) target = $region41
    $region40: #{actor_forward.1} parent=1 // pred_region
      %75 = dma.done [#allocation8], 512
    $region41: #{actor_forward.1} parent=1 // pred_fallthru
      _
    %v76 = vld [vmem:[#allocation2] sm:$0xff]
    %v77 = vld [vmem:[#allocation4] sm:$0xff]
    %v78 = vld [vmem:[#allocation4 + $0x8] sm:$0xff]
    %v79 = vld [vmem:[%s3] sm:$0x1]
    %v80 = vlaneseq
    %v81 = vshrl.u32 %v80, 7
    %v82 = vsub.s32 0, %v81
    %v83 = vrot.slane %v79, %v82
    %vm84 = vcmask 130048
    %v86 = vsel %vm84, %v76, 0
    %88 = vmatprep.subr.mxu0 0.0
    %v89 = vand.u32 %v77, 4294901760
    %90 = vmatpush1.msra.mxu0 %v89
    %91 = vmatprep.subr.mxu0 0.0
    %v92 = vand.u32 %v78, 4294901760
    %93 = vmatpush1.msra.mxu0 %v92
    %94 = vmatprep.subr.mxu0 0.0
    %95 = vmatpush1.msra.mxu0 0.0
    %96 = vmatprep.subr.mxu0 0.0
    %97 = vmatpush1.msra.mxu0 0.0
    %98 = vmatprep.subr.mxu0 0.0
    %99 = vmatpush1.msra.mxu0 0.0
    %100 = vmatprep.subr.mxu0 0.0
    %101 = vmatpush1.msra.mxu0 0.0
    %102 = vmatprep.subr.mxu0 0.0
    %103 = vmatpush1.msra.mxu0 0.0
    %104 = vmatprep.subr.mxu0 0.0
    %105 = vmatpush1.msra.mxu0 0.0
    %106 = vmatprep.subr.mxu0 0.0
    %107 = vmatpush1.msra.mxu0 0.0
    %108 = vmatprep.subr.mxu0 0.0
    %109 = vmatpush1.msra.mxu0 0.0
    %110 = vmatprep.subr.mxu0 0.0
    %111 = vmatpush1.msra.mxu0 0.0
    %112 = vmatprep.subr.mxu0 0.0
    %113 = vmatpush1.msra.mxu0 0.0
    %114 = vmatprep.subr.mxu0 0.0
    %115 = vmatpush1.msra.mxu0 0.0
    %116 = vmatprep.subr.mxu0 0.0
    %117 = vmatpush1.msra.mxu0 0.0
    %118 = vmatprep.subr.mxu0 0.0
    %119 = vmatpush1.msra.mxu0 0.0
    %120 = vmatprep.subr.mxu0 0.0
    %121 = vmatpush1.msra.mxu0 0.0
    %122 = vmatprep.subr.mxu0 0.0
    %123 = vmatpush1.msra.mxu0 0.0
    %124 = vmatprep.subr.mxu0 0.0
    %125 = vmatpush1.msra.mxu0 0.0
    %126 = vmatprep.subr.mxu0 0.0
    %127 = vmatpush1.msra.mxu0 0.0
    %128 = vmatprep.subr.mxu0 0.0
    %129 = vmatpush1.msra.mxu0 0.0
    %130 = vmatprep.subr.mxu0 0.0
    %131 = vmatpush1.msra.mxu0 0.0
    %132 = vmatprep.subr.mxu0 0.0
    %133 = vmatpush1.msra.mxu0 0.0
    %134 = vmatprep.subr.mxu0 0.0
    %135 = vmatpush1.msra.mxu0 0.0
    %136 = vmatprep.subr.mxu0 0.0
    %137 = vmatpush1.msra.mxu0 0.0
    %138 = vmatprep.subr.mxu0 0.0
    %139 = vmatpush1.msra.mxu0 0.0
    %140 = vmatprep.subr.mxu0 0.0
    %141 = vmatpush1.msra.mxu0 0.0
    %142 = vmatprep.subr.mxu0 0.0
    %143 = vmatpush1.msra.mxu0 0.0
    %144 = vmatprep.subr.mxu0 0.0
    %145 = vmatpush1.msra.mxu0 0.0
    %146 = vmatprep.subr.mxu0 0.0
    %147 = vmatpush1.msra.mxu0 0.0
    %148 = vmatprep.subr.mxu0 0.0
    %149 = vmatpush1.msra.mxu0 0.0
    %150 = vmatprep.subr.mxu0 0.0
    %151 = vmatpush1.msra.mxu0 0.0
    %152 = vmatprep.subr.mxu0 0.0
    %153 = vmatpush1.msra.mxu0 0.0
    %154 = vmatprep.mubr.f32.mxu0 0.0
    %v155 = vand.u32 %v86, 4294901760
    %v156 = vsub.f32 %v86, %v155
    %v157 = vand.u32 %v156, 4294901760
    %v158 = vsub.f32 %v156, %v157
    %v159 = vand.u32 %v158, 4294901760
    %160 = vmatmul.mubr.f32.gmra.mrb[0].mxu0 %v159
    %v161 = vpop.f32.mrb[0].mxu0
    %v162 = vadd.f32 %v83, %v161
    %v163 = vpop.f32.mrb[0].mxu0
    %164 = vdwg.mxu0
    %165 = vmatprep.subr.mxu0 0.0
    %v166 = vand.u32 %v77, 4294901760
    %v167 = vsub.f32 %v77, %v166
    %v168 = vand.u32 %v167, 4294901760
    %v169 = vsub.f32 %v167, %v168
    %v170 = vand.u32 %v169, 4294901760
    %171 = vmatpush1.msra.mxu0 %v170
    %172 = vmatprep.subr.mxu0 0.0
    %v173 = vand.u32 %v78, 4294901760
    %v174 = vsub.f32 %v78, %v173
    %v175 = vand.u32 %v174, 4294901760
    %v176 = vsub.f32 %v174, %v175
    %v177 = vand.u32 %v176, 4294901760
    %178 = vmatpush1.msra.mxu0 %v177
    %179 = vmatprep.subr.mxu0 0.0
    %180 = vmatpush1.msra.mxu0 0.0
    %181 = vmatprep.subr.mxu0 0.0
    %182 = vmatpush1.msra.mxu0 0.0
    %183 = vmatprep.subr.mxu0 0.0
    %184 = vmatpush1.msra.mxu0 0.0
    %185 = vmatprep.subr.mxu0 0.0
    %186 = vmatpush1.msra.mxu0 0.0
    %187 = vmatprep.subr.mxu0 0.0
    %188 = vmatpush1.msra.mxu0 0.0
    %189 = vmatprep.subr.mxu0 0.0
    %190 = vmatpush1.msra.mxu0 0.0
    %191 = vmatprep.subr.mxu0 0.0
    %192 = vmatpush1.msra.mxu0 0.0
    %193 = vmatprep.subr.mxu0 0.0
    %194 = vmatpush1.msra.mxu0 0.0
    %195 = vmatprep.subr.mxu0 0.0
    %196 = vmatpush1.msra.mxu0 0.0
    %197 = vmatprep.subr.mxu0 0.0
    %198 = vmatpush1.msra.mxu0 0.0
    %199 = vmatprep.subr.mxu0 0.0
    %200 = vmatpush1.msra.mxu0 0.0
    %201 = vmatprep.subr.mxu0 0.0
    %202 = vmatpush1.msra.mxu0 0.0
    %203 = vmatprep.subr.mxu0 0.0
    %204 = vmatpush1.msra.mxu0 0.0
    %205 = vmatprep.subr.mxu0 0.0
    %206 = vmatpush1.msra.mxu0 0.0
    %207 = vmatprep.subr.mxu0 0.0
    %208 = vmatpush1.msra.mxu0 0.0
    %209 = vmatprep.subr.mxu0 0.0
    %210 = vmatpush1.msra.mxu0 0.0
    %211 = vmatprep.subr.mxu0 0.0
    %212 = vmatpush1.msra.mxu0 0.0
    %213 = vmatprep.subr.mxu0 0.0
    %214 = vmatpush1.msra.mxu0 0.0
    %215 = vmatprep.subr.mxu0 0.0
    %216 = vmatpush1.msra.mxu0 0.0
    %217 = vmatprep.subr.mxu0 0.0
    %218 = vmatpush1.msra.mxu0 0.0
    %219 = vmatprep.subr.mxu0 0.0
    %220 = vmatpush1.msra.mxu0 0.0
    %221 = vmatprep.subr.mxu0 0.0
    %222 = vmatpush1.msra.mxu0 0.0
    %223 = vmatprep.subr.mxu0 0.0
    %224 = vmatpush1.msra.mxu0 0.0
    %225 = vmatprep.subr.mxu0 0.0
    %226 = vmatpush1.msra.mxu0 0.0
    %227 = vmatprep.subr.mxu0 0.0
    %228 = vmatpush1.msra.mxu0 0.0
    %229 = vmatprep.subr.mxu0 0.0
    %230 = vmatpush1.msra.mxu0 0.0
    %231 = vmatprep.subr.mxu0 0.0
    %232 = vmatpush1.msra.mxu0 0.0
    %233 = vmatprep.subr.mxu0 0.0
    %234 = vmatpush1.msra.mxu0 0.0
    %235 = vmatprep.subr.mxu0 0.0
    %236 = vmatpush1.msra.mxu0 0.0
    %237 = vmatprep.subr.mxu0 0.0
    %238 = vmatpush1.msra.mxu0 0.0
    %239 = vmatprep.mubr.f32.mxu0 0.0
    %v240 = vand.u32 %v86, 4294901760
    %241 = vmatmul.mubr.f32.gmra.mrb[0].mxu0 %v240
    %v242 = vpop.f32.mrb[0].mxu0
    %v243 = vadd.f32 %v162, %v242
    %v244 = vpop.f32.mrb[0].mxu0
    %245 = vdwg.mxu0
    %246 = vmatprep.subr.mxu0 0.0
    %v247 = vand.u32 %v77, 4294901760
    %v248 = vsub.f32 %v77, %v247
    %249 = vmatpush1.msra.mxu0 %v248
    %250 = vmatprep.subr.mxu0 0.0
    %v251 = vand.u32 %v78, 4294901760
    %v252 = vsub.f32 %v78, %v251
    %253 = vmatpush1.msra.mxu0 %v252
    %254 = vmatprep.subr.mxu0 0.0
    %255 = vmatpush1.msra.mxu0 0.0
    %256 = vmatprep.subr.mxu0 0.0
    %257 = vmatpush1.msra.mxu0 0.0
    %258 = vmatprep.subr.mxu0 0.0
    %259 = vmatpush1.msra.mxu0 0.0
    %260 = vmatprep.subr.mxu0 0.0
    %261 = vmatpush1.msra.mxu0 0.0
    %262 = vmatprep.subr.mxu0 0.0
    %263 = vmatpush1.msra.mxu0 0.0
    %264 = vmatprep.subr.mxu0 0.0
    %265 = vmatpush1.msra.mxu0 0.0
    %266 = vmatprep.subr.mxu0 0.0
    %267 = vmatpush1.msra.mxu0 0.0
    %268 = vmatprep.subr.mxu0 0.0
    %269 = vmatpush1.msra.mxu0 0.0
    %270 = vmatprep.subr.mxu0 0.0
    %271 = vmatpush1.msra.mxu0 0.0
    %272 = vmatprep.subr.mxu0 0.0
    %273 = vmatpush1.msra.mxu0 0.0
    %274 = vmatprep.subr.mxu0 0.0
    %275 = vmatpush1.msra.mxu0 0.0
    %276 = vmatprep.subr.mxu0 0.0
    %277 = vmatpush1.msra.mxu0 0.0
    %278 = vmatprep.subr.mxu0 0.0
    %279 = vmatpush1.msra.mxu0 0.0
    %280 = vmatprep.subr.mxu0 0.0
    %281 = vmatpush1.msra.mxu0 0.0
    %282 = vmatprep.subr.mxu0 0.0
    %283 = vmatpush1.msra.mxu0 0.0
    %284 = vmatprep.subr.mxu0 0.0
    %285 = vmatpush1.msra.mxu0 0.0
    %286 = vmatprep.subr.mxu0 0.0
    %287 = vmatpush1.msra.mxu0 0.0
    %288 = vmatprep.subr.mxu0 0.0
    %289 = vmatpush1.msra.mxu0 0.0
    %290 = vmatprep.subr.mxu0 0.0
    %291 = vmatpush1.msra.mxu0 0.0
    %292 = vmatprep.subr.mxu0 0.0
    %293 = vmatpush1.msra.mxu0 0.0
    %294 = vmatprep.subr.mxu0 0.0
    %295 = vmatpush1.msra.mxu0 0.0
    %296 = vmatprep.subr.mxu0 0.0
    %297 = vmatpush1.msra.mxu0 0.0
    %298 = vmatprep.subr.mxu0 0.0
    %299 = vmatpush1.msra.mxu0 0.0
    %300 = vmatprep.subr.mxu0 0.0
    %301 = vmatpush1.msra.mxu0 0.0
    %302 = vmatprep.subr.mxu0 0.0
    %303 = vmatpush1.msra.mxu0 0.0
    %304 = vmatprep.subr.mxu0 0.0
    %305 = vmatpush1.msra.mxu0 0.0
    %306 = vmatprep.subr.mxu0 0.0
    %307 = vmatpush1.msra.mxu0 0.0
    %308 = vmatprep.subr.mxu0 0.0
    %309 = vmatpush1.msra.mxu0 0.0
    %310 = vmatprep.subr.mxu0 0.0
    %311 = vmatpush1.msra.mxu0 0.0
    %312 = vmatprep.subr.mxu0 0.0
    %313 = vmatpush1.msra.mxu0 0.0
    %314 = vmatprep.mubr.f32.mxu0 0.0
    %v315 = vand.u32 %v86, 4294901760
    %v316 = vsub.f32 %v86, %v315
    %317 = vmatmul.mubr.f32.gmra.mrb[0].mxu0 %v316
    %v318 = vpop.f32.mrb[0].mxu0
    %v319 = vadd.f32 %v243, %v318
    %v320 = vpop.f32.mrb[0].mxu0
    %321 = vdwg.mxu0
    %322 = vmatprep.subr.mxu0 0.0
    %v323 = vand.u32 %v77, 4294901760
    %324 = vmatpush1.msra.mxu0 %v323
    %325 = vmatprep.subr.mxu0 0.0
    %v326 = vand.u32 %v78, 4294901760
    %327 = vmatpush1.msra.mxu0 %v326
    %328 = vmatprep.subr.mxu0 0.0
    %329 = vmatpush1.msra.mxu0 0.0
    %330 = vmatprep.subr.mxu0 0.0
    %331 = vmatpush1.msra.mxu0 0.0
    %332 = vmatprep.subr.mxu0 0.0
    %333 = vmatpush1.msra.mxu0 0.0
    %334 = vmatprep.subr.mxu0 0.0
    %335 = vmatpush1.msra.mxu0 0.0
    %336 = vmatprep.subr.mxu0 0.0
    %337 = vmatpush1.msra.mxu0 0.0
    %338 = vmatprep.subr.mxu0 0.0
    %339 = vmatpush1.msra.mxu0 0.0
    %340 = vmatprep.subr.mxu0 0.0
    %341 = vmatpush1.msra.mxu0 0.0
    %342 = vmatprep.subr.mxu0 0.0
    %343 = vmatpush1.msra.mxu0 0.0
    %344 = vmatprep.subr.mxu0 0.0
    %345 = vmatpush1.msra.mxu0 0.0
    %346 = vmatprep.subr.mxu0 0.0
    %347 = vmatpush1.msra.mxu0 0.0
    %348 = vmatprep.subr.mxu0 0.0
    %349 = vmatpush1.msra.mxu0 0.0
    %350 = vmatprep.subr.mxu0 0.0
    %351 = vmatpush1.msra.mxu0 0.0
    %352 = vmatprep.subr.mxu0 0.0
    %353 = vmatpush1.msra.mxu0 0.0
    %354 = vmatprep.subr.mxu0 0.0
    %355 = vmatpush1.msra.mxu0 0.0
    %356 = vmatprep.subr.mxu0 0.0
    %357 = vmatpush1.msra.mxu0 0.0
    %358 = vmatprep.subr.mxu0 0.0
    %359 = vmatpush1.msra.mxu0 0.0
    %360 = vmatprep.subr.mxu0 0.0
    %361 = vmatpush1.msra.mxu0 0.0
    %362 = vmatprep.subr.mxu0 0.0
    %363 = vmatpush1.msra.mxu0 0.0
    %364 = vmatprep.subr.mxu0 0.0
    %365 = vmatpush1.msra.mxu0 0.0
    %366 = vmatprep.subr.mxu0 0.0
    %367 = vmatpush1.msra.mxu0 0.0
    %368 = vmatprep.subr.mxu0 0.0
    %369 = vmatpush1.msra.mxu0 0.0
    %370 = vmatprep.subr.mxu0 0.0
    %371 = vmatpush1.msra.mxu0 0.0
    %372 = vmatprep.subr.mxu0 0.0
    %373 = vmatpush1.msra.mxu0 0.0
    %374 = vmatprep.subr.mxu0 0.0
    %375 = vmatpush1.msra.mxu0 0.0
    %376 = vmatprep.subr.mxu0 0.0
    %377 = vmatpush1.msra.mxu0 0.0
    %378 = vmatprep.subr.mxu0 0.0
    %379 = vmatpush1.msra.mxu0 0.0
    %380 = vmatprep.subr.mxu0 0.0
    %381 = vmatpush1.msra.mxu0 0.0
    %382 = vmatprep.subr.mxu0 0.0
    %383 = vmatpush1.msra.mxu0 0.0
    %384 = vmatprep.subr.mxu0 0.0
    %385 = vmatpush1.msra.mxu0 0.0
    %386 = vmatprep.subr.mxu0 0.0
    %387 = vmatpush1.msra.mxu0 0.0
    %388 = vmatprep.mubr.f32.mxu0 0.0
    %v389 = vand.u32 %v86, 4294901760
    %v390 = vsub.f32 %v86, %v389
    %v391 = vand.u32 %v390, 4294901760
    %392 = vmatmul.mubr.f32.gmra.mrb[0].mxu0 %v391
    %v393 = vpop.f32.mrb[0].mxu0
    %v394 = vadd.f32 %v319, %v393
    %v395 = vpop.f32.mrb[0].mxu0
    %396 = vdwg.mxu0
    %397 = vmatprep.subr.mxu0 0.0
    %v398 = vand.u32 %v77, 4294901760
    %v399 = vsub.f32 %v77, %v398
    %v400 = vand.u32 %v399, 4294901760
    %401 = vmatpush1.msra.mxu0 %v400
    %402 = vmatprep.subr.mxu0 0.0
    %v403 = vand.u32 %v78, 4294901760
    %v404 = vsub.f32 %v78, %v403
    %v405 = vand.u32 %v404, 4294901760
    %406 = vmatpush1.msra.mxu0 %v405
    %407 = vmatprep.subr.mxu0 0.0
    %408 = vmatpush1.msra.mxu0 0.0
    %409 = vmatprep.subr.mxu0 0.0
    %410 = vmatpush1.msra.mxu0 0.0
    %411 = vmatprep.subr.mxu0 0.0
    %412 = vmatpush1.msra.mxu0 0.0
    %413 = vmatprep.subr.mxu0 0.0
    %414 = vmatpush1.msra.mxu0 0.0
    %415 = vmatprep.subr.mxu0 0.0
    %416 = vmatpush1.msra.mxu0 0.0
    %417 = vmatprep.subr.mxu0 0.0
    %418 = vmatpush1.msra.mxu0 0.0
    %419 = vmatprep.subr.mxu0 0.0
    %420 = vmatpush1.msra.mxu0 0.0
    %421 = vmatprep.subr.mxu0 0.0
    %422 = vmatpush1.msra.mxu0 0.0
    %423 = vmatprep.subr.mxu0 0.0
    %424 = vmatpush1.msra.mxu0 0.0
    %425 = vmatprep.subr.mxu0 0.0
    %426 = vmatpush1.msra.mxu0 0.0
    %427 = vmatprep.subr.mxu0 0.0
    %428 = vmatpush1.msra.mxu0 0.0
    %429 = vmatprep.subr.mxu0 0.0
    %430 = vmatpush1.msra.mxu0 0.0
    %431 = vmatprep.subr.mxu0 0.0
    %432 = vmatpush1.msra.mxu0 0.0
    %433 = vmatprep.subr.mxu0 0.0
    %434 = vmatpush1.msra.mxu0 0.0
    %435 = vmatprep.subr.mxu0 0.0
    %436 = vmatpush1.msra.mxu0 0.0
    %437 = vmatprep.subr.mxu0 0.0
    %438 = vmatpush1.msra.mxu0 0.0
    %439 = vmatprep.subr.mxu0 0.0
    %440 = vmatpush1.msra.mxu0 0.0
    %441 = vmatprep.subr.mxu0 0.0
    %442 = vmatpush1.msra.mxu0 0.0
    %443 = vmatprep.subr.mxu0 0.0
    %444 = vmatpush1.msra.mxu0 0.0
    %445 = vmatprep.subr.mxu0 0.0
    %446 = vmatpush1.msra.mxu0 0.0
    %447 = vmatprep.subr.mxu0 0.0
    %448 = vmatpush1.msra.mxu0 0.0
    %449 = vmatprep.subr.mxu0 0.0
    %450 = vmatpush1.msra.mxu0 0.0
    %451 = vmatprep.subr.mxu0 0.0
    %452 = vmatpush1.msra.mxu0 0.0
    %453 = vmatprep.subr.mxu0 0.0
    %454 = vmatpush1.msra.mxu0 0.0
    %455 = vmatprep.subr.mxu0 0.0
    %456 = vmatpush1.msra.mxu0 0.0
    %457 = vmatprep.subr.mxu0 0.0
    %458 = vmatpush1.msra.mxu0 0.0
    %459 = vmatprep.subr.mxu0 0.0
    %460 = vmatpush1.msra.mxu0 0.0
    %461 = vmatprep.subr.mxu0 0.0
    %462 = vmatpush1.msra.mxu0 0.0
    %463 = vmatprep.subr.mxu0 0.0
    %464 = vmatpush1.msra.mxu0 0.0
    %465 = vmatprep.subr.mxu0 0.0
    %466 = vmatpush1.msra.mxu0 0.0
    %467 = vmatprep.mubr.f32.mxu0 0.0
    %v468 = vand.u32 %v86, 4294901760
    %469 = vmatmul.mubr.f32.gmra.mrb[0].mxu0 %v468
    %v470 = vpop.f32.mrb[0].mxu0
    %v471 = vadd.f32 %v394, %v470
    %v472 = vpop.f32.mrb[0].mxu0
    %473 = vdwg.mxu0
    %474 = vmatprep.subr.mxu0 0.0
    %v475 = vand.u32 %v77, 4294901760
    %476 = vmatpush1.msra.mxu0 %v475
    %477 = vmatprep.subr.mxu0 0.0
    %v478 = vand.u32 %v78, 4294901760
    %479 = vmatpush1.msra.mxu0 %v478
    %480 = vmatprep.subr.mxu0 0.0
    %481 = vmatpush1.msra.mxu0 0.0
    %482 = vmatprep.subr.mxu0 0.0
    %483 = vmatpush1.msra.mxu0 0.0
    %484 = vmatprep.subr.mxu0 0.0
    %485 = vmatpush1.msra.mxu0 0.0
    %486 = vmatprep.subr.mxu0 0.0
    %487 = vmatpush1.msra.mxu0 0.0
    %488 = vmatprep.subr.mxu0 0.0
    %489 = vmatpush1.msra.mxu0 0.0
    %490 = vmatprep.subr.mxu0 0.0
    %491 = vmatpush1.msra.mxu0 0.0
    %492 = vmatprep.subr.mxu0 0.0
    %493 = vmatpush1.msra.mxu0 0.0
    %494 = vmatprep.subr.mxu0 0.0
    %495 = vmatpush1.msra.mxu0 0.0
    %496 = vmatprep.subr.mxu0 0.0
    %497 = vmatpush1.msra.mxu0 0.0
    %498 = vmatprep.subr.mxu0 0.0
    %499 = vmatpush1.msra.mxu0 0.0
    %500 = vmatprep.subr.mxu0 0.0
    %501 = vmatpush1.msra.mxu0 0.0
    %502 = vmatprep.subr.mxu0 0.0
    %503 = vmatpush1.msra.mxu0 0.0
    %504 = vmatprep.subr.mxu0 0.0
    %505 = vmatpush1.msra.mxu0 0.0
    %506 = vmatprep.subr.mxu0 0.0
    %507 = vmatpush1.msra.mxu0 0.0
    %508 = vmatprep.subr.mxu0 0.0
    %509 = vmatpush1.msra.mxu0 0.0
    %510 = vmatprep.subr.mxu0 0.0
    %511 = vmatpush1.msra.mxu0 0.0
    %512 = vmatprep.subr.mxu0 0.0
    %513 = vmatpush1.msra.mxu0 0.0
    %514 = vmatprep.subr.mxu0 0.0
    %515 = vmatpush1.msra.mxu0 0.0
    %516 = vmatprep.subr.mxu0 0.0
    %517 = vmatpush1.msra.mxu0 0.0
    %518 = vmatprep.subr.mxu0 0.0
    %519 = vmatpush1.msra.mxu0 0.0
    %520 = vmatprep.subr.mxu0 0.0
    %521 = vmatpush1.msra.mxu0 0.0
    %522 = vmatprep.subr.mxu0 0.0
    %523 = vmatpush1.msra.mxu0 0.0
    %524 = vmatprep.subr.mxu0 0.0
    %525 = vmatpush1.msra.mxu0 0.0
    %526 = vmatprep.subr.mxu0 0.0
    %527 = vmatpush1.msra.mxu0 0.0
    %528 = vmatprep.subr.mxu0 0.0
    %529 = vmatpush1.msra.mxu0 0.0
    %530 = vmatprep.subr.mxu0 0.0
    %531 = vmatpush1.msra.mxu0 0.0
    %532 = vmatprep.subr.mxu0 0.0
    %533 = vmatpush1.msra.mxu0 0.0
    %534 = vmatprep.subr.mxu0 0.0
    %535 = vmatpush1.msra.mxu0 0.0
    %536 = vmatprep.subr.mxu0 0.0
    %537 = vmatpush1.msra.mxu0 0.0
    %538 = vmatprep.subr.mxu0 0.0
    %539 = vmatpush1.msra.mxu0 0.0
    %540 = vmatprep.mubr.f32.mxu0 0.0
    %v541 = vand.u32 %v86, 4294901760
    %542 = vmatmul.mubr.f32.gmra.mrb[0].mxu0 %v541
    %v543 = vpop.f32.mrb[0].mxu0
    %v544 = vadd.f32 %v471, %v543
    %v545 = vpop.f32.mrb[0].mxu0
    %546 = vdwg.mxu0
    %v547 = vmax.f32 %v544, 0.0
    %v548 = vld [vmem:[#allocation6] sm:$0xff]
    %v549 = vld [vmem:[#allocation6 + $0x8] sm:$0xff]
    %v550 = vld [vmem:[#allocation6 + $0x10] sm:$0xff]
    %v551 = vld [vmem:[#allocation6 + $0x18] sm:$0xff]
    %v552 = vld [vmem:[%s3 + $0x1] sm:$0x1]
    %v553 = vlaneseq
    %v554 = vshrl.u32 %v553, 7
    %v555 = vsub.s32 0, %v554
    %v556 = vrot.slane %v552, %v555
    %vm557 = vcmask 261120
    %v559 = vsel %vm557, %v547, 0
    %561 = vmatprep.subr.mxu0 0.0
    %v562 = vand.u32 %v548, 4294901760
    %563 = vmatpush1.msra.mxu0 %v562
    %564 = vmatprep.subr.mxu0 0.0
    %v565 = vand.u32 %v549, 4294901760
    %566 = vmatpush1.msra.mxu0 %v565
    %567 = vmatprep.subr.mxu0 0.0
    %v568 = vand.u32 %v550, 4294901760
    %569 = vmatpush1.msra.mxu0 %v568
    %570 = vmatprep.subr.mxu0 0.0
    %v571 = vand.u32 %v551, 4294901760
    %572 = vmatpush1.msra.mxu0 %v571
    %573 = vmatprep.subr.mxu0 0.0
    %574 = vmatpush1.msra.mxu0 0.0
    %575 = vmatprep.subr.mxu0 0.0
    %576 = vmatpush1.msra.mxu0 0.0
    %577 = vmatprep.subr.mxu0 0.0
    %578 = vmatpush1.msra.mxu0 0.0
    %579 = vmatprep.subr.mxu0 0.0
    %580 = vmatpush1.msra.mxu0 0.0
    %581 = vmatprep.subr.mxu0 0.0
    %582 = vmatpush1.msra.mxu0 0.0
    %583 = vmatprep.subr.mxu0 0.0
    %584 = vmatpush1.msra.mxu0 0.0
    %585 = vmatprep.subr.mxu0 0.0
    %586 = vmatpush1.msra.mxu0 0.0
    %587 = vmatprep.subr.mxu0 0.0
    %588 = vmatpush1.msra.mxu0 0.0
    %589 = vmatprep.subr.mxu0 0.0
    %590 = vmatpush1.msra.mxu0 0.0
    %591 = vmatprep.subr.mxu0 0.0
    %592 = vmatpush1.msra.mxu0 0.0
    %593 = vmatprep.subr.mxu0 0.0
    %594 = vmatpush1.msra.mxu0 0.0
    %595 = vmatprep.subr.mxu0 0.0
    %596 = vmatpush1.msra.mxu0 0.0
    %597 = vmatprep.subr.mxu0 0.0
    %598 = vmatpush1.msra.mxu0 0.0
    %599 = vmatprep.subr.mxu0 0.0
    %600 = vmatpush1.msra.mxu0 0.0
    %601 = vmatprep.subr.mxu0 0.0
    %602 = vmatpush1.msra.mxu0 0.0
    %603 = vmatprep.subr.mxu0 0.0
    %604 = vmatpush1.msra.mxu0 0.0
    %605 = vmatprep.subr.mxu0 0.0
    %606 = vmatpush1.msra.mxu0 0.0
    %607 = vmatprep.subr.mxu0 0.0
    %608 = vmatpush1.msra.mxu0 0.0
    %609 = vmatprep.subr.mxu0 0.0
    %610 = vmatpush1.msra.mxu0 0.0
    %611 = vmatprep.subr.mxu0 0.0
    %612 = vmatpush1.msra.mxu0 0.0
    %613 = vmatprep.subr.mxu0 0.0
    %614 = vmatpush1.msra.mxu0 0.0
    %615 = vmatprep.subr.mxu0 0.0
    %616 = vmatpush1.msra.mxu0 0.0
    %617 = vmatprep.subr.mxu0 0.0
    %618 = vmatpush1.msra.mxu0 0.0
    %619 = vmatprep.subr.mxu0 0.0
    %620 = vmatpush1.msra.mxu0 0.0
    %621 = vmatprep.subr.mxu0 0.0
    %622 = vmatpush1.msra.mxu0 0.0
    %623 = vmatprep.subr.mxu0 0.0
    %624 = vmatpush1.msra.mxu0 0.0
    %625 = vmatprep.subr.mxu0 0.0
    %626 = vmatpush1.msra.mxu0 0.0
    %627 = vmatprep.subr.mxu0 0.0
    %628 = vmatpush1.msra.mxu0 0.0
    %629 = vmatprep.mubr.f32.mxu0 0.0
    %v630 = vand.u32 %v559, 4294901760
    %v631 = vsub.f32 %v559, %v630
    %v632 = vand.u32 %v631, 4294901760
    %v633 = vsub.f32 %v631, %v632
    %v634 = vand.u32 %v633, 4294901760
    %635 = vmatmul.mubr.f32.gmra.mrb[0].mxu0 %v634
    %v636 = vpop.f32.mrb[0].mxu0
    %v637 = vadd.f32 %v556, %v636
    %v638 = vpop.f32.mrb[0].mxu0
    %639 = vdwg.mxu0
    %640 = vmatprep.subr.mxu0 0.0
    %v641 = vand.u32 %v548, 4294901760
    %v642 = vsub.f32 %v548, %v641
    %v643 = vand.u32 %v642, 4294901760
    %v644 = vsub.f32 %v642, %v643
    %v645 = vand.u32 %v644, 4294901760
    %646 = vmatpush1.msra.mxu0 %v645
    %647 = vmatprep.subr.mxu0 0.0
    %v648 = vand.u32 %v549, 4294901760
    %v649 = vsub.f32 %v549, %v648
    %v650 = vand.u32 %v649, 4294901760
    %v651 = vsub.f32 %v649, %v650
    %v652 = vand.u32 %v651, 4294901760
    %653 = vmatpush1.msra.mxu0 %v652
    %654 = vmatprep.subr.mxu0 0.0
    %v655 = vand.u32 %v550, 4294901760
    %v656 = vsub.f32 %v550, %v655
    %v657 = vand.u32 %v656, 4294901760
    %v658 = vsub.f32 %v656, %v657
    %v659 = vand.u32 %v658, 4294901760
    %660 = vmatpush1.msra.mxu0 %v659
    %661 = vmatprep.subr.mxu0 0.0
    %v662 = vand.u32 %v551, 4294901760
    %v663 = vsub.f32 %v551, %v662
    %v664 = vand.u32 %v663, 4294901760
    %v665 = vsub.f32 %v663, %v664
    %v666 = vand.u32 %v665, 4294901760
    %667 = vmatpush1.msra.mxu0 %v666
    %668 = vmatprep.subr.mxu0 0.0
    %669 = vmatpush1.msra.mxu0 0.0
    %670 = vmatprep.subr.mxu0 0.0
    %671 = vmatpush1.msra.mxu0 0.0
    %672 = vmatprep.subr.mxu0 0.0
    %673 = vmatpush1.msra.mxu0 0.0
    %674 = vmatprep.subr.mxu0 0.0
    %675 = vmatpush1.msra.mxu0 0.0
    %676 = vmatprep.subr.mxu0 0.0
    %677 = vmatpush1.msra.mxu0 0.0
    %678 = vmatprep.subr.mxu0 0.0
    %679 = vmatpush1.msra.mxu0 0.0
    %680 = vmatprep.subr.mxu0 0.0
    %681 = vmatpush1.msra.mxu0 0.0
    %682 = vmatprep.subr.mxu0 0.0
    %683 = vmatpush1.msra.mxu0 0.0
    %684 = vmatprep.subr.mxu0 0.0
    %685 = vmatpush1.msra.mxu0 0.0
    %686 = vmatprep.subr.mxu0 0.0
    %687 = vmatpush1.msra.mxu0 0.0
    %688 = vmatprep.subr.mxu0 0.0
    %689 = vmatpush1.msra.mxu0 0.0
    %690 = vmatprep.subr.mxu0 0.0
    %691 = vmatpush1.msra.mxu0 0.0
    %692 = vmatprep.subr.mxu0 0.0
    %693 = vmatpush1.msra.mxu0 0.0
    %694 = vmatprep.subr.mxu0 0.0
    %695 = vmatpush1.msra.mxu0 0.0
    %696 = vmatprep.subr.mxu0 0.0
    %697 = vmatpush1.msra.mxu0 0.0
    %698 = vmatprep.subr.mxu0 0.0
    %699 = vmatpush1.msra.mxu0 0.0
    %700 = vmatprep.subr.mxu0 0.0
    %701 = vmatpush1.msra.mxu0 0.0
    %702 = vmatprep.subr.mxu0 0.0
    %703 = vmatpush1.msra.mxu0 0.0
    %704 = vmatprep.subr.mxu0 0.0
    %705 = vmatpush1.msra.mxu0 0.0
    %706 = vmatprep.subr.mxu0 0.0
    %707 = vmatpush1.msra.mxu0 0.0
    %708 = vmatprep.subr.mxu0 0.0
    %709 = vmatpush1.msra.mxu0 0.0
    %710 = vmatprep.subr.mxu0 0.0
    %711 = vmatpush1.msra.mxu0 0.0
    %712 = vmatprep.subr.mxu0 0.0
    %713 = vmatpush1.msra.mxu0 0.0
    %714 = vmatprep.subr.mxu0 0.0
    %715 = vmatpush1.msra.mxu0 0.0
    %716 = vmatprep.subr.mxu0 0.0
    %717 = vmatpush1.msra.mxu0 0.0
    %718 = vmatprep.subr.mxu0 0.0
    %719 = vmatpush1.msra.mxu0 0.0
    %720 = vmatprep.subr.mxu0 0.0
    %721 = vmatpush1.msra.mxu0 0.0
    %722 = vmatprep.subr.mxu0 0.0
    %723 = vmatpush1.msra.mxu0 0.0
    %724 = vmatprep.mubr.f32.mxu0 0.0
    %v725 = vand.u32 %v559, 4294901760
    %726 = vmatmul.mubr.f32.gmra.mrb[0].mxu0 %v725
    %v727 = vpop.f32.mrb[0].mxu0
    %v728 = vadd.f32 %v637, %v727
    %v729 = vpop.f32.mrb[0].mxu0
    %730 = vdwg.mxu0
    %731 = vmatprep.subr.mxu0 0.0
    %v732 = vand.u32 %v548, 4294901760
    %v733 = vsub.f32 %v548, %v732
    %734 = vmatpush1.msra.mxu0 %v733
    %735 = vmatprep.subr.mxu0 0.0
    %v736 = vand.u32 %v549, 4294901760
    %v737 = vsub.f32 %v549, %v736
    %738 = vmatpush1.msra.mxu0 %v737
    %739 = vmatprep.subr.mxu0 0.0
    %v740 = vand.u32 %v550, 4294901760
    %v741 = vsub.f32 %v550, %v740
    %742 = vmatpush1.msra.mxu0 %v741
    %743 = vmatprep.subr.mxu0 0.0
    %v744 = vand.u32 %v551, 4294901760
    %v745 = vsub.f32 %v551, %v744
    %746 = vmatpush1.msra.mxu0 %v745
    %747 = vmatprep.subr.mxu0 0.0
    %748 = vmatpush1.msra.mxu0 0.0
    %749 = vmatprep.subr.mxu0 0.0
    %750 = vmatpush1.msra.mxu0 0.0
    %751 = vmatprep.subr.mxu0 0.0
    %752 = vmatpush1.msra.mxu0 0.0
    %753 = vmatprep.subr.mxu0 0.0
    %754 = vmatpush1.msra.mxu0 0.0
    %755 = vmatprep.subr.mxu0 0.0
    %756 = vmatpush1.msra.mxu0 0.0
    %757 = vmatprep.subr.mxu0 0.0
    %758 = vmatpush1.msra.mxu0 0.0
    %759 = vmatprep.subr.mxu0 0.0
    %760 = vmatpush1.msra.mxu0 0.0
    %761 = vmatprep.subr.mxu0 0.0
    %762 = vmatpush1.msra.mxu0 0.0
    %763 = vmatprep.subr.mxu0 0.0
    %764 = vmatpush1.msra.mxu0 0.0
    %765 = vmatprep.subr.mxu0 0.0
    %766 = vmatpush1.msra.mxu0 0.0
    %767 = vmatprep.subr.mxu0 0.0
    %768 = vmatpush1.msra.mxu0 0.0
    %769 = vmatprep.subr.mxu0 0.0
    %770 = vmatpush1.msra.mxu0 0.0
    %771 = vmatprep.subr.mxu0 0.0
    %772 = vmatpush1.msra.mxu0 0.0
    %773 = vmatprep.subr.mxu0 0.0
    %774 = vmatpush1.msra.mxu0 0.0
    %775 = vmatprep.subr.mxu0 0.0
    %776 = vmatpush1.msra.mxu0 0.0
    %777 = vmatprep.subr.mxu0 0.0
    %778 = vmatpush1.msra.mxu0 0.0
    %779 = vmatprep.subr.mxu0 0.0
    %780 = vmatpush1.msra.mxu0 0.0
    %781 = vmatprep.subr.mxu0 0.0
    %782 = vmatpush1.msra.mxu0 0.0
    %783 = vmatprep.subr.mxu0 0.0
    %784 = vmatpush1.msra.mxu0 0.0
    %785 = vmatprep.subr.mxu0 0.0
    %786 = vmatpush1.msra.mxu0 0.0
    %787 = vmatprep.subr.mxu0 0.0
    %788 = vmatpush1.msra.mxu0 0.0
    %789 = vmatprep.subr.mxu0 0.0
    %790 = vmatpush1.msra.mxu0 0.0
    %791 = vmatprep.subr.mxu0 0.0
    %792 = vmatpush1.msra.mxu0 0.0
    %793 = vmatprep.subr.mxu0 0.0
    %794 = vmatpush1.msra.mxu0 0.0
    %795 = vmatprep.subr.mxu0 0.0
    %796 = vmatpush1.msra.mxu0 0.0
    %797 = vmatprep.subr.mxu0 0.0
    %798 = vmatpush1.msra.mxu0 0.0
    %799 = vmatprep.subr.mxu0 0.0
    %800 = vmatpush1.msra.mxu0 0.0
    %801 = vmatprep.subr.mxu0 0.0
    %802 = vmatpush1.msra.mxu0 0.0
    %803 = vmatprep.mubr.f32.mxu0 0.0
    %v804 = vand.u32 %v559, 4294901760
    %v805 = vsub.f32 %v559, %v804
    %806 = vmatmul.mubr.f32.gmra.mrb[0].mxu0 %v805
    %v807 = vpop.f32.mrb[0].mxu0
    %v808 = vadd.f32 %v728, %v807
    %v809 = vpop.f32.mrb[0].mxu0
    %810 = vdwg.mxu0
    %811 = vmatprep.subr.mxu0 0.0
    %v812 = vand.u32 %v548, 4294901760
    %813 = vmatpush1.msra.mxu0 %v812
    %814 = vmatprep.subr.mxu0 0.0
    %v815 = vand.u32 %v549, 4294901760
    %816 = vmatpush1.msra.mxu0 %v815
    %817 = vmatprep.subr.mxu0 0.0
    %v818 = vand.u32 %v550, 4294901760
    %819 = vmatpush1.msra.mxu0 %v818
    %820 = vmatprep.subr.mxu0 0.0
    %v821 = vand.u32 %v551, 4294901760
    %822 = vmatpush1.msra.mxu0 %v821
    %823 = vmatprep.subr.mxu0 0.0
    %824 = vmatpush1.msra.mxu0 0.0
    %825 = vmatprep.subr.mxu0 0.0
    %826 = vmatpush1.msra.mxu0 0.0
    %827 = vmatprep.subr.mxu0 0.0
    %828 = vmatpush1.msra.mxu0 0.0
    %829 = vmatprep.subr.mxu0 0.0
    %830 = vmatpush1.msra.mxu0 0.0
    %831 = vmatprep.subr.mxu0 0.0
    %832 = vmatpush1.msra.mxu0 0.0
    %833 = vmatprep.subr.mxu0 0.0
    %834 = vmatpush1.msra.mxu0 0.0
    %835 = vmatprep.subr.mxu0 0.0
    %836 = vmatpush1.msra.mxu0 0.0
    %837 = vmatprep.subr.mxu0 0.0
    %838 = vmatpush1.msra.mxu0 0.0
    %839 = vmatprep.subr.mxu0 0.0
    %840 = vmatpush1.msra.mxu0 0.0
    %841 = vmatprep.subr.mxu0 0.0
    %842 = vmatpush1.msra.mxu0 0.0
    %843 = vmatprep.subr.mxu0 0.0
    %844 = vmatpush1.msra.mxu0 0.0
    %845 = vmatprep.subr.mxu0 0.0
    %846 = vmatpush1.msra.mxu0 0.0
    %847 = vmatprep.subr.mxu0 0.0
    %848 = vmatpush1.msra.mxu0 0.0
    %849 = vmatprep.subr.mxu0 0.0
    %850 = vmatpush1.msra.mxu0 0.0
    %851 = vmatprep.subr.mxu0 0.0
    %852 = vmatpush1.msra.mxu0 0.0
    %853 = vmatprep.subr.mxu0 0.0
    %854 = vmatpush1.msra.mxu0 0.0
    %855 = vmatprep.subr.mxu0 0.0
    %856 = vmatpush1.msra.mxu0 0.0
    %857 = vmatprep.subr.mxu0 0.0
    %858 = vmatpush1.msra.mxu0 0.0
    %859 = vmatprep.subr.mxu0 0.0
    %860 = vmatpush1.msra.mxu0 0.0
    %861 = vmatprep.subr.mxu0 0.0
    %862 = vmatpush1.msra.mxu0 0.0
    %863 = vmatprep.subr.mxu0 0.0
    %864 = vmatpush1.msra.mxu0 0.0
    %865 = vmatprep.subr.mxu0 0.0
    %866 = vmatpush1.msra.mxu0 0.0
    %867 = vmatprep.subr.mxu0 0.0
    %868 = vmatpush1.msra.mxu0 0.0
    %869 = vmatprep.subr.mxu0 0.0
    %870 = vmatpush1.msra.mxu0 0.0
    %871 = vmatprep.subr.mxu0 0.0
    %872 = vmatpush1.msra.mxu0 0.0
    %873 = vmatprep.subr.mxu0 0.0
    %874 = vmatpush1.msra.mxu0 0.0
    %875 = vmatprep.subr.mxu0 0.0
    %876 = vmatpush1.msra.mxu0 0.0
    %877 = vmatprep.subr.mxu0 0.0
    %878 = vmatpush1.msra.mxu0 0.0
    %879 = vmatprep.mubr.f32.mxu0 0.0
    %v880 = vand.u32 %v559, 4294901760
    %v881 = vsub.f32 %v559, %v880
    %v882 = vand.u32 %v881, 4294901760
    %883 = vmatmul.mubr.f32.gmra.mrb[0].mxu0 %v882
    %v884 = vpop.f32.mrb[0].mxu0
    %v885 = vadd.f32 %v808, %v884
    %v886 = vpop.f32.mrb[0].mxu0
    %887 = vdwg.mxu0
    %888 = vmatprep.subr.mxu0 0.0
    %v889 = vand.u32 %v548, 4294901760
    %v890 = vsub.f32 %v548, %v889
    %v891 = vand.u32 %v890, 4294901760
    %892 = vmatpush1.msra.mxu0 %v891
    %893 = vmatprep.subr.mxu0 0.0
    %v894 = vand.u32 %v549, 4294901760
    %v895 = vsub.f32 %v549, %v894
    %v896 = vand.u32 %v895, 4294901760
    %897 = vmatpush1.msra.mxu0 %v896
    %898 = vmatprep.subr.mxu0 0.0
    %v899 = vand.u32 %v550, 4294901760
    %v900 = vsub.f32 %v550, %v899
    %v901 = vand.u32 %v900, 4294901760
    %902 = vmatpush1.msra.mxu0 %v901
    %903 = vmatprep.subr.mxu0 0.0
    %v904 = vand.u32 %v551, 4294901760
    %v905 = vsub.f32 %v551, %v904
    %v906 = vand.u32 %v905, 4294901760
    %907 = vmatpush1.msra.mxu0 %v906
    %908 = vmatprep.subr.mxu0 0.0
    %909 = vmatpush1.msra.mxu0 0.0
    %910 = vmatprep.subr.mxu0 0.0
    %911 = vmatpush1.msra.mxu0 0.0
    %912 = vmatprep.subr.mxu0 0.0
    %913 = vmatpush1.msra.mxu0 0.0
    %914 = vmatprep.subr.mxu0 0.0
    %915 = vmatpush1.msra.mxu0 0.0
    %916 = vmatprep.subr.mxu0 0.0
    %917 = vmatpush1.msra.mxu0 0.0
    %918 = vmatprep.subr.mxu0 0.0
    %919 = vmatpush1.msra.mxu0 0.0
    %920 = vmatprep.subr.mxu0 0.0
    %921 = vmatpush1.msra.mxu0 0.0
    %922 = vmatprep.subr.mxu0 0.0
    %923 = vmatpush1.msra.mxu0 0.0
    %924 = vmatprep.subr.mxu0 0.0
    %925 = vmatpush1.msra.mxu0 0.0
    %926 = vmatprep.subr.mxu0 0.0
    %927 = vmatpush1.msra.mxu0 0.0
    %928 = vmatprep.subr.mxu0 0.0
    %929 = vmatpush1.msra.mxu0 0.0
    %930 = vmatprep.subr.mxu0 0.0
    %931 = vmatpush1.msra.mxu0 0.0
    %932 = vmatprep.subr.mxu0 0.0
    %933 = vmatpush1.msra.mxu0 0.0
    %934 = vmatprep.subr.mxu0 0.0
    %935 = vmatpush1.msra.mxu0 0.0
    %936 = vmatprep.subr.mxu0 0.0
    %937 = vmatpush1.msra.mxu0 0.0
    %938 = vmatprep.subr.mxu0 0.0
    %939 = vmatpush1.msra.mxu0 0.0
    %940 = vmatprep.subr.mxu0 0.0
    %941 = vmatpush1.msra.mxu0 0.0
    %942 = vmatprep.subr.mxu0 0.0
    %943 = vmatpush1.msra.mxu0 0.0
    %944 = vmatprep.subr.mxu0 0.0
    %945 = vmatpush1.msra.mxu0 0.0
    %946 = vmatprep.subr.mxu0 0.0
    %947 = vmatpush1.msra.mxu0 0.0
    %948 = vmatprep.subr.mxu0 0.0
    %949 = vmatpush1.msra.mxu0 0.0
    %950 = vmatprep.subr.mxu0 0.0
    %951 = vmatpush1.msra.mxu0 0.0
    %952 = vmatprep.subr.mxu0 0.0
    %953 = vmatpush1.msra.mxu0 0.0
    %954 = vmatprep.subr.mxu0 0.0
    %955 = vmatpush1.msra.mxu0 0.0
    %956 = vmatprep.subr.mxu0 0.0
    %957 = vmatpush1.msra.mxu0 0.0
    %958 = vmatprep.subr.mxu0 0.0
    %959 = vmatpush1.msra.mxu0 0.0
    %960 = vmatprep.subr.mxu0 0.0
    %961 = vmatpush1.msra.mxu0 0.0
    %962 = vmatprep.subr.mxu0 0.0
    %963 = vmatpush1.msra.mxu0 0.0
    %964 = vmatprep.mubr.f32.mxu0 0.0
    %v965 = vand.u32 %v559, 4294901760
    %966 = vmatmul.mubr.f32.gmra.mrb[0].mxu0 %v965
    %v967 = vpop.f32.mrb[0].mxu0
    %v968 = vadd.f32 %v885, %v967
    %v969 = vpop.f32.mrb[0].mxu0
    %970 = vdwg.mxu0
    %971 = vmatprep.subr.mxu0 0.0
    %v972 = vand.u32 %v548, 4294901760
    %973 = vmatpush1.msra.mxu0 %v972
    %974 = vmatprep.subr.mxu0 0.0
    %v975 = vand.u32 %v549, 4294901760
    %976 = vmatpush1.msra.mxu0 %v975
    %977 = vmatprep.subr.mxu0 0.0
    %v978 = vand.u32 %v550, 4294901760
    %979 = vmatpush1.msra.mxu0 %v978
    %980 = vmatprep.subr.mxu0 0.0
    %v981 = vand.u32 %v551, 4294901760
    %982 = vmatpush1.msra.mxu0 %v981
    %983 = vmatprep.subr.mxu0 0.0
    %984 = vmatpush1.msra.mxu0 0.0
    %985 = vmatprep.subr.mxu0 0.0
    %986 = vmatpush1.msra.mxu0 0.0
    %987 = vmatprep.subr.mxu0 0.0
    %988 = vmatpush1.msra.mxu0 0.0
    %989 = vmatprep.subr.mxu0 0.0
    %990 = vmatpush1.msra.mxu0 0.0
    %991 = vmatprep.subr.mxu0 0.0
    %992 = vmatpush1.msra.mxu0 0.0
    %993 = vmatprep.subr.mxu0 0.0
    %994 = vmatpush1.msra.mxu0 0.0
    %995 = vmatprep.subr.mxu0 0.0
    %996 = vmatpush1.msra.mxu0 0.0
    %997 = vmatprep.subr.mxu0 0.0
    %998 = vmatpush1.msra.mxu0 0.0
    %999 = vmatprep.subr.mxu0 0.0
    %1000 = vmatpush1.msra.mxu0 0.0
    %1001 = vmatprep.subr.mxu0 0.0
    %1002 = vmatpush1.msra.mxu0 0.0
    %1003 = vmatprep.subr.mxu0 0.0
    %1004 = vmatpush1.msra.mxu0 0.0
    %1005 = vmatprep.subr.mxu0 0.0
    %1006 = vmatpush1.msra.mxu0 0.0
    %1007 = vmatprep.subr.mxu0 0.0
    %1008 = vmatpush1.msra.mxu0 0.0
    %1009 = vmatprep.subr.mxu0 0.0
    %1010 = vmatpush1.msra.mxu0 0.0
    %1011 = vmatprep.subr.mxu0 0.0
    %1012 = vmatpush1.msra.mxu0 0.0
    %1013 = vmatprep.subr.mxu0 0.0
    %1014 = vmatpush1.msra.mxu0 0.0
    %1015 = vmatprep.subr.mxu0 0.0
    %1016 = vmatpush1.msra.mxu0 0.0
    %1017 = vmatprep.subr.mxu0 0.0
    %1018 = vmatpush1.msra.mxu0 0.0
    %1019 = vmatprep.subr.mxu0 0.0
    %1020 = vmatpush1.msra.mxu0 0.0
    %1021 = vmatprep.subr.mxu0 0.0
    %1022 = vmatpush1.msra.mxu0 0.0
    %1023 = vmatprep.subr.mxu0 0.0
    %1024 = vmatpush1.msra.mxu0 0.0
    %1025 = vmatprep.subr.mxu0 0.0
    %1026 = vmatpush1.msra.mxu0 0.0
    %1027 = vmatprep.subr.mxu0 0.0
    %1028 = vmatpush1.msra.mxu0 0.0
    %1029 = vmatprep.subr.mxu0 0.0
    %1030 = vmatpush1.msra.mxu0 0.0
    %1031 = vmatprep.subr.mxu0 0.0
    %1032 = vmatpush1.msra.mxu0 0.0
    %1033 = vmatprep.subr.mxu0 0.0
    %1034 = vmatpush1.msra.mxu0 0.0
    %1035 = vmatprep.subr.mxu0 0.0
    %1036 = vmatpush1.msra.mxu0 0.0
    %1037 = vmatprep.subr.mxu0 0.0
    %1038 = vmatpush1.msra.mxu0 0.0
    %1039 = vmatprep.mubr.f32.mxu0 0.0
    %v1040 = vand.u32 %v559, 4294901760
    %1041 = vmatmul.mubr.f32.gmra.mrb[0].mxu0 %v1040
    %v1042 = vpop.f32.mrb[0].mxu0
    %v1043 = vadd.f32 %v968, %v1042
    %v1044 = vpop.f32.mrb[0].mxu0
    %1045 = vdwg.mxu0
    %v1046 = vmax.f32 %v1043, 0.0
    %v1047 = vld [vmem:[#allocation7] sm:$0xff]
    %v1048 = vld [vmem:[#allocation7 + $0x8] sm:$0xff]
    %v1049 = vld [vmem:[#allocation7 + $0x10] sm:$0xff]
    %v1050 = vld [vmem:[#allocation7 + $0x18] sm:$0xff]
    %v1051 = vld [vmem:[%s5] sm:$0x1]
    %v1053 = vlaneseq
    %v1054 = vshrl.u32 %v1053, 7
    %v1055 = vsub.s32 0, %v1054
    %v1056 = vrot.slane %v1051, %v1055
    %v1059 = vsel %vm557, %v1046, 0
    %1061 = vmatprep.subr.mxu0 0.0
    %v1062 = vand.u32 %v1047, 4294901760
    %1063 = vmatpush1.msra.mxu0 %v1062
    %1064 = vmatprep.subr.mxu0 0.0
    %v1065 = vand.u32 %v1048, 4294901760
    %1066 = vmatpush1.msra.mxu0 %v1065
    %1067 = vmatprep.subr.mxu0 0.0
    %v1068 = vand.u32 %v1049, 4294901760
    %1069 = vmatpush1.msra.mxu0 %v1068
    %1070 = vmatprep.subr.mxu0 0.0
    %v1071 = vand.u32 %v1050, 4294901760
    %1072 = vmatpush1.msra.mxu0 %v1071
    %1073 = vmatprep.subr.mxu0 0.0
    %1074 = vmatpush1.msra.mxu0 0.0
    %1075 = vmatprep.subr.mxu0 0.0
    %1076 = vmatpush1.msra.mxu0 0.0
    %1077 = vmatprep.subr.mxu0 0.0
    %1078 = vmatpush1.msra.mxu0 0.0
    %1079 = vmatprep.subr.mxu0 0.0
    %1080 = vmatpush1.msra.mxu0 0.0
    %1081 = vmatprep.subr.mxu0 0.0
    %1082 = vmatpush1.msra.mxu0 0.0
    %1083 = vmatprep.subr.mxu0 0.0
    %1084 = vmatpush1.msra.mxu0 0.0
    %1085 = vmatprep.subr.mxu0 0.0
    %1086 = vmatpush1.msra.mxu0 0.0
    %1087 = vmatprep.subr.mxu0 0.0
    %1088 = vmatpush1.msra.mxu0 0.0
    %1089 = vmatprep.subr.mxu0 0.0
    %1090 = vmatpush1.msra.mxu0 0.0
    %1091 = vmatprep.subr.mxu0 0.0
    %1092 = vmatpush1.msra.mxu0 0.0
    %1093 = vmatprep.subr.mxu0 0.0
    %1094 = vmatpush1.msra.mxu0 0.0
    %1095 = vmatprep.subr.mxu0 0.0
    %1096 = vmatpush1.msra.mxu0 0.0
    %1097 = vmatprep.subr.mxu0 0.0
    %1098 = vmatpush1.msra.mxu0 0.0
    %1099 = vmatprep.subr.mxu0 0.0
    %1100 = vmatpush1.msra.mxu0 0.0
    %1101 = vmatprep.subr.mxu0 0.0
    %1102 = vmatpush1.msra.mxu0 0.0
    %1103 = vmatprep.subr.mxu0 0.0
    %1104 = vmatpush1.msra.mxu0 0.0
    %1105 = vmatprep.subr.mxu0 0.0
    %1106 = vmatpush1.msra.mxu0 0.0
    %1107 = vmatprep.subr.mxu0 0.0
    %1108 = vmatpush1.msra.mxu0 0.0
    %1109 = vmatprep.subr.mxu0 0.0
    %1110 = vmatpush1.msra.mxu0 0.0
    %1111 = vmatprep.subr.mxu0 0.0
    %1112 = vmatpush1.msra.mxu0 0.0
    %1113 = vmatprep.subr.mxu0 0.0
    %1114 = vmatpush1.msra.mxu0 0.0
    %1115 = vmatprep.subr.mxu0 0.0
    %1116 = vmatpush1.msra.mxu0 0.0
    %1117 = vmatprep.subr.mxu0 0.0
    %1118 = vmatpush1.msra.mxu0 0.0
    %1119 = vmatprep.subr.mxu0 0.0
    %1120 = vmatpush1.msra.mxu0 0.0
    %1121 = vmatprep.subr.mxu0 0.0
    %1122 = vmatpush1.msra.mxu0 0.0
    %1123 = vmatprep.subr.mxu0 0.0
    %1124 = vmatpush1.msra.mxu0 0.0
    %1125 = vmatprep.subr.mxu0 0.0
    %1126 = vmatpush1.msra.mxu0 0.0
    %1127 = vmatprep.subr.mxu0 0.0
    %1128 = vmatpush1.msra.mxu0 0.0
    %1129 = vmatprep.mubr.f32.mxu0 0.0
    %v1130 = vand.u32 %v1059, 4294901760
    %v1131 = vsub.f32 %v1059, %v1130
    %v1132 = vand.u32 %v1131, 4294901760
    %v1133 = vsub.f32 %v1131, %v1132
    %v1134 = vand.u32 %v1133, 4294901760
    %1135 = vmatmul.mubr.f32.gmra.mrb[0].mxu0 %v1134
    %v1136 = vpop.f32.mrb[0].mxu0
    %v1137 = vadd.f32 %v1056, %v1136
    %v1138 = vpop.f32.mrb[0].mxu0
    %1139 = vdwg.mxu0
    %1140 = vmatprep.subr.mxu0 0.0
    %v1141 = vand.u32 %v1047, 4294901760
    %v1142 = vsub.f32 %v1047, %v1141
    %v1143 = vand.u32 %v1142, 4294901760
    %v1144 = vsub.f32 %v1142, %v1143
    %v1145 = vand.u32 %v1144, 4294901760
    %1146 = vmatpush1.msra.mxu0 %v1145
    %1147 = vmatprep.subr.mxu0 0.0
    %v1148 = vand.u32 %v1048, 4294901760
    %v1149 = vsub.f32 %v1048, %v1148
    %v1150 = vand.u32 %v1149, 4294901760
    %v1151 = vsub.f32 %v1149, %v1150
    %v1152 = vand.u32 %v1151, 4294901760
    %1153 = vmatpush1.msra.mxu0 %v1152
    %1154 = vmatprep.subr.mxu0 0.0
    %v1155 = vand.u32 %v1049, 4294901760
    %v1156 = vsub.f32 %v1049, %v1155
    %v1157 = vand.u32 %v1156, 4294901760
    %v1158 = vsub.f32 %v1156, %v1157
    %v1159 = vand.u32 %v1158, 4294901760
    %1160 = vmatpush1.msra.mxu0 %v1159
    %1161 = vmatprep.subr.mxu0 0.0
    %v1162 = vand.u32 %v1050, 4294901760
    %v1163 = vsub.f32 %v1050, %v1162
    %v1164 = vand.u32 %v1163, 4294901760
    %v1165 = vsub.f32 %v1163, %v1164
    %v1166 = vand.u32 %v1165, 4294901760
    %1167 = vmatpush1.msra.mxu0 %v1166
    %1168 = vmatprep.subr.mxu0 0.0
    %1169 = vmatpush1.msra.mxu0 0.0
    %1170 = vmatprep.subr.mxu0 0.0
    %1171 = vmatpush1.msra.mxu0 0.0
    %1172 = vmatprep.subr.mxu0 0.0
    %1173 = vmatpush1.msra.mxu0 0.0
    %1174 = vmatprep.subr.mxu0 0.0
    %1175 = vmatpush1.msra.mxu0 0.0
    %1176 = vmatprep.subr.mxu0 0.0
    %1177 = vmatpush1.msra.mxu0 0.0
    %1178 = vmatprep.subr.mxu0 0.0
    %1179 = vmatpush1.msra.mxu0 0.0
    %1180 = vmatprep.subr.mxu0 0.0
    %1181 = vmatpush1.msra.mxu0 0.0
    %1182 = vmatprep.subr.mxu0 0.0
    %1183 = vmatpush1.msra.mxu0 0.0
    %1184 = vmatprep.subr.mxu0 0.0
    %1185 = vmatpush1.msra.mxu0 0.0
    %1186 = vmatprep.subr.mxu0 0.0
    %1187 = vmatpush1.msra.mxu0 0.0
    %1188 = vmatprep.subr.mxu0 0.0
    %1189 = vmatpush1.msra.mxu0 0.0
    %1190 = vmatprep.subr.mxu0 0.0
    %1191 = vmatpush1.msra.mxu0 0.0
    %1192 = vmatprep.subr.mxu0 0.0
    %1193 = vmatpush1.msra.mxu0 0.0
    %1194 = vmatprep.subr.mxu0 0.0
    %1195 = vmatpush1.msra.mxu0 0.0
    %1196 = vmatprep.subr.mxu0 0.0
    %1197 = vmatpush1.msra.mxu0 0.0
    %1198 = vmatprep.subr.mxu0 0.0
    %1199 = vmatpush1.msra.mxu0 0.0
    %1200 = vmatprep.subr.mxu0 0.0
    %1201 = vmatpush1.msra.mxu0 0.0
    %1202 = vmatprep.subr.mxu0 0.0
    %1203 = vmatpush1.msra.mxu0 0.0
    %1204 = vmatprep.subr.mxu0 0.0
    %1205 = vmatpush1.msra.mxu0 0.0
    %1206 = vmatprep.subr.mxu0 0.0
    %1207 = vmatpush1.msra.mxu0 0.0
    %1208 = vmatprep.subr.mxu0 0.0
    %1209 = vmatpush1.msra.mxu0 0.0
    %1210 = vmatprep.subr.mxu0 0.0
    %1211 = vmatpush1.msra.mxu0 0.0
    %1212 = vmatprep.subr.mxu0 0.0
    %1213 = vmatpush1.msra.mxu0 0.0
    %1214 = vmatprep.subr.mxu0 0.0
    %1215 = vmatpush1.msra.mxu0 0.0
    %1216 = vmatprep.subr.mxu0 0.0
    %1217 = vmatpush1.msra.mxu0 0.0
    %1218 = vmatprep.subr.mxu0 0.0
    %1219 = vmatpush1.msra.mxu0 0.0
    %1220 = vmatprep.subr.mxu0 0.0
    %1221 = vmatpush1.msra.mxu0 0.0
    %1222 = vmatprep.subr.mxu0 0.0
    %1223 = vmatpush1.msra.mxu0 0.0
    %1224 = vmatprep.mubr.f32.mxu0 0.0
    %v1225 = vand.u32 %v1059, 4294901760
    %1226 = vmatmul.mubr.f32.gmra.mrb[0].mxu0 %v1225
    %v1227 = vpop.f32.mrb[0].mxu0
    %v1228 = vadd.f32 %v1137, %v1227
    %v1229 = vpop.f32.mrb[0].mxu0
    %1230 = vdwg.mxu0
    %1231 = vmatprep.subr.mxu0 0.0
    %v1232 = vand.u32 %v1047, 4294901760
    %v1233 = vsub.f32 %v1047, %v1232
    %1234 = vmatpush1.msra.mxu0 %v1233
    %1235 = vmatprep.subr.mxu0 0.0
    %v1236 = vand.u32 %v1048, 4294901760
    %v1237 = vsub.f32 %v1048, %v1236
    %1238 = vmatpush1.msra.mxu0 %v1237
    %1239 = vmatprep.subr.mxu0 0.0
    %v1240 = vand.u32 %v1049, 4294901760
    %v1241 = vsub.f32 %v1049, %v1240
    %1242 = vmatpush1.msra.mxu0 %v1241
    %1243 = vmatprep.subr.mxu0 0.0
    %v1244 = vand.u32 %v1050, 4294901760
    %v1245 = vsub.f32 %v1050, %v1244
    %1246 = vmatpush1.msra.mxu0 %v1245
    %1247 = vmatprep.subr.mxu0 0.0
    %1248 = vmatpush1.msra.mxu0 0.0
    %1249 = vmatprep.subr.mxu0 0.0
    %1250 = vmatpush1.msra.mxu0 0.0
    %1251 = vmatprep.subr.mxu0 0.0
    %1252 = vmatpush1.msra.mxu0 0.0
    %1253 = vmatprep.subr.mxu0 0.0
    %1254 = vmatpush1.msra.mxu0 0.0
    %1255 = vmatprep.subr.mxu0 0.0
    %1256 = vmatpush1.msra.mxu0 0.0
    %1257 = vmatprep.subr.mxu0 0.0
    %1258 = vmatpush1.msra.mxu0 0.0
    %1259 = vmatprep.subr.mxu0 0.0
    %1260 = vmatpush1.msra.mxu0 0.0
    %1261 = vmatprep.subr.mxu0 0.0
    %1262 = vmatpush1.msra.mxu0 0.0
    %1263 = vmatprep.subr.mxu0 0.0
    %1264 = vmatpush1.msra.mxu0 0.0
    %1265 = vmatprep.subr.mxu0 0.0
    %1266 = vmatpush1.msra.mxu0 0.0
    %1267 = vmatprep.subr.mxu0 0.0
    %1268 = vmatpush1.msra.mxu0 0.0
    %1269 = vmatprep.subr.mxu0 0.0
    %1270 = vmatpush1.msra.mxu0 0.0
    %1271 = vmatprep.subr.mxu0 0.0
    %1272 = vmatpush1.msra.mxu0 0.0
    %1273 = vmatprep.subr.mxu0 0.0
    %1274 = vmatpush1.msra.mxu0 0.0
    %1275 = vmatprep.subr.mxu0 0.0
    %1276 = vmatpush1.msra.mxu0 0.0
    %1277 = vmatprep.subr.mxu0 0.0
    %1278 = vmatpush1.msra.mxu0 0.0
    %1279 = vmatprep.subr.mxu0 0.0
    %1280 = vmatpush1.msra.mxu0 0.0
    %1281 = vmatprep.subr.mxu0 0.0
    %1282 = vmatpush1.msra.mxu0 0.0
    %1283 = vmatprep.subr.mxu0 0.0
    %1284 = vmatpush1.msra.mxu0 0.0
    %1285 = vmatprep.subr.mxu0 0.0
    %1286 = vmatpush1.msra.mxu0 0.0
    %1287 = vmatprep.subr.mxu0 0.0
    %1288 = vmatpush1.msra.mxu0 0.0
    %1289 = vmatprep.subr.mxu0 0.0
    %1290 = vmatpush1.msra.mxu0 0.0
    %1291 = vmatprep.subr.mxu0 0.0
    %1292 = vmatpush1.msra.mxu0 0.0
    %1293 = vmatprep.subr.mxu0 0.0
    %1294 = vmatpush1.msra.mxu0 0.0
    %1295 = vmatprep.subr.mxu0 0.0
    %1296 = vmatpush1.msra.mxu0 0.0
    %1297 = vmatprep.subr.mxu0 0.0
    %1298 = vmatpush1.msra.mxu0 0.0
    %1299 = vmatprep.subr.mxu0 0.0
    %1300 = vmatpush1.msra.mxu0 0.0
    %1301 = vmatprep.subr.mxu0 0.0
    %1302 = vmatpush1.msra.mxu0 0.0
    %1303 = vmatprep.mubr.f32.mxu0 0.0
    %v1304 = vand.u32 %v1059, 4294901760
    %v1305 = vsub.f32 %v1059, %v1304
    %1306 = vmatmul.mubr.f32.gmra.mrb[0].mxu0 %v1305
    %v1307 = vpop.f32.mrb[0].mxu0
    %v1308 = vadd.f32 %v1228, %v1307
    %v1309 = vpop.f32.mrb[0].mxu0
    %1310 = vdwg.mxu0
    %1311 = vmatprep.subr.mxu0 0.0
    %v1312 = vand.u32 %v1047, 4294901760
    %1313 = vmatpush1.msra.mxu0 %v1312
    %1314 = vmatprep.subr.mxu0 0.0
    %v1315 = vand.u32 %v1048, 4294901760
    %1316 = vmatpush1.msra.mxu0 %v1315
    %1317 = vmatprep.subr.mxu0 0.0
    %v1318 = vand.u32 %v1049, 4294901760
    %1319 = vmatpush1.msra.mxu0 %v1318
    %1320 = vmatprep.subr.mxu0 0.0
    %v1321 = vand.u32 %v1050, 4294901760
    %1322 = vmatpush1.msra.mxu0 %v1321
    %1323 = vmatprep.subr.mxu0 0.0
    %1324 = vmatpush1.msra.mxu0 0.0
    %1325 = vmatprep.subr.mxu0 0.0
    %1326 = vmatpush1.msra.mxu0 0.0
    %1327 = vmatprep.subr.mxu0 0.0
    %1328 = vmatpush1.msra.mxu0 0.0
    %1329 = vmatprep.subr.mxu0 0.0
    %1330 = vmatpush1.msra.mxu0 0.0
    %1331 = vmatprep.subr.mxu0 0.0
    %1332 = vmatpush1.msra.mxu0 0.0
    %1333 = vmatprep.subr.mxu0 0.0
    %1334 = vmatpush1.msra.mxu0 0.0
    %1335 = vmatprep.subr.mxu0 0.0
    %1336 = vmatpush1.msra.mxu0 0.0
    %1337 = vmatprep.subr.mxu0 0.0
    %1338 = vmatpush1.msra.mxu0 0.0
    %1339 = vmatprep.subr.mxu0 0.0
    %1340 = vmatpush1.msra.mxu0 0.0
    %1341 = vmatprep.subr.mxu0 0.0
    %1342 = vmatpush1.msra.mxu0 0.0
    %1343 = vmatprep.subr.mxu0 0.0
    %1344 = vmatpush1.msra.mxu0 0.0
    %1345 = vmatprep.subr.mxu0 0.0
    %1346 = vmatpush1.msra.mxu0 0.0
    %1347 = vmatprep.subr.mxu0 0.0
    %1348 = vmatpush1.msra.mxu0 0.0
    %1349 = vmatprep.subr.mxu0 0.0
    %1350 = vmatpush1.msra.mxu0 0.0
    %1351 = vmatprep.subr.mxu0 0.0
    %1352 = vmatpush1.msra.mxu0 0.0
    %1353 = vmatprep.subr.mxu0 0.0
    %1354 = vmatpush1.msra.mxu0 0.0
    %1355 = vmatprep.subr.mxu0 0.0
    %1356 = vmatpush1.msra.mxu0 0.0
    %1357 = vmatprep.subr.mxu0 0.0
    %1358 = vmatpush1.msra.mxu0 0.0
    %1359 = vmatprep.subr.mxu0 0.0
    %1360 = vmatpush1.msra.mxu0 0.0
    %1361 = vmatprep.subr.mxu0 0.0
    %1362 = vmatpush1.msra.mxu0 0.0
    %1363 = vmatprep.subr.mxu0 0.0
    %1364 = vmatpush1.msra.mxu0 0.0
    %1365 = vmatprep.subr.mxu0 0.0
    %1366 = vmatpush1.msra.mxu0 0.0
    %1367 = vmatprep.subr.mxu0 0.0
    %1368 = vmatpush1.msra.mxu0 0.0
    %1369 = vmatprep.subr.mxu0 0.0
    %1370 = vmatpush1.msra.mxu0 0.0
    %1371 = vmatprep.subr.mxu0 0.0
    %1372 = vmatpush1.msra.mxu0 0.0
    %1373 = vmatprep.subr.mxu0 0.0
    %1374 = vmatpush1.msra.mxu0 0.0
    %1375 = vmatprep.subr.mxu0 0.0
    %1376 = vmatpush1.msra.mxu0 0.0
    %1377 = vmatprep.subr.mxu0 0.0
    %1378 = vmatpush1.msra.mxu0 0.0
    %1379 = vmatprep.mubr.f32.mxu0 0.0
    %v1380 = vand.u32 %v1059, 4294901760
    %v1381 = vsub.f32 %v1059, %v1380
    %v1382 = vand.u32 %v1381, 4294901760
    %1383 = vmatmul.mubr.f32.gmra.mrb[0].mxu0 %v1382
    %v1384 = vpop.f32.mrb[0].mxu0
    %v1385 = vadd.f32 %v1308, %v1384
    %v1386 = vpop.f32.mrb[0].mxu0
    %1387 = vdwg.mxu0
    %1388 = vmatprep.subr.mxu0 0.0
    %v1389 = vand.u32 %v1047, 4294901760
    %v1390 = vsub.f32 %v1047, %v1389
    %v1391 = vand.u32 %v1390, 4294901760
    %1392 = vmatpush1.msra.mxu0 %v1391
    %1393 = vmatprep.subr.mxu0 0.0
    %v1394 = vand.u32 %v1048, 4294901760
    %v1395 = vsub.f32 %v1048, %v1394
    %v1396 = vand.u32 %v1395, 4294901760
    %1397 = vmatpush1.msra.mxu0 %v1396
    %1398 = vmatprep.subr.mxu0 0.0
    %v1399 = vand.u32 %v1049, 4294901760
    %v1400 = vsub.f32 %v1049, %v1399
    %v1401 = vand.u32 %v1400, 4294901760
    %1402 = vmatpush1.msra.mxu0 %v1401
    %1403 = vmatprep.subr.mxu0 0.0
    %v1404 = vand.u32 %v1050, 4294901760
    %v1405 = vsub.f32 %v1050, %v1404
    %v1406 = vand.u32 %v1405, 4294901760
    %1407 = vmatpush1.msra.mxu0 %v1406
    %1408 = vmatprep.subr.mxu0 0.0
    %1409 = vmatpush1.msra.mxu0 0.0
    %1410 = vmatprep.subr.mxu0 0.0
    %1411 = vmatpush1.msra.mxu0 0.0
    %1412 = vmatprep.subr.mxu0 0.0
    %1413 = vmatpush1.msra.mxu0 0.0
    %1414 = vmatprep.subr.mxu0 0.0
    %1415 = vmatpush1.msra.mxu0 0.0
    %1416 = vmatprep.subr.mxu0 0.0
    %1417 = vmatpush1.msra.mxu0 0.0
    %1418 = vmatprep.subr.mxu0 0.0
    %1419 = vmatpush1.msra.mxu0 0.0
    %1420 = vmatprep.subr.mxu0 0.0
    %1421 = vmatpush1.msra.mxu0 0.0
    %1422 = vmatprep.subr.mxu0 0.0
    %1423 = vmatpush1.msra.mxu0 0.0
    %1424 = vmatprep.subr.mxu0 0.0
    %1425 = vmatpush1.msra.mxu0 0.0
    %1426 = vmatprep.subr.mxu0 0.0
    %1427 = vmatpush1.msra.mxu0 0.0
    %1428 = vmatprep.subr.mxu0 0.0
    %1429 = vmatpush1.msra.mxu0 0.0
    %1430 = vmatprep.subr.mxu0 0.0
    %1431 = vmatpush1.msra.mxu0 0.0
    %1432 = vmatprep.subr.mxu0 0.0
    %1433 = vmatpush1.msra.mxu0 0.0
    %1434 = vmatprep.subr.mxu0 0.0
    %1435 = vmatpush1.msra.mxu0 0.0
    %1436 = vmatprep.subr.mxu0 0.0
    %1437 = vmatpush1.msra.mxu0 0.0
    %1438 = vmatprep.subr.mxu0 0.0
    %1439 = vmatpush1.msra.mxu0 0.0
    %1440 = vmatprep.subr.mxu0 0.0
    %1441 = vmatpush1.msra.mxu0 0.0
    %1442 = vmatprep.subr.mxu0 0.0
    %1443 = vmatpush1.msra.mxu0 0.0
    %1444 = vmatprep.subr.mxu0 0.0
    %1445 = vmatpush1.msra.mxu0 0.0
    %1446 = vmatprep.subr.mxu0 0.0
    %1447 = vmatpush1.msra.mxu0 0.0
    %1448 = vmatprep.subr.mxu0 0.0
    %1449 = vmatpush1.msra.mxu0 0.0
    %1450 = vmatprep.subr.mxu0 0.0
    %1451 = vmatpush1.msra.mxu0 0.0
    %1452 = vmatprep.subr.mxu0 0.0
    %1453 = vmatpush1.msra.mxu0 0.0
    %1454 = vmatprep.subr.mxu0 0.0
    %1455 = vmatpush1.msra.mxu0 0.0
    %1456 = vmatprep.subr.mxu0 0.0
    %1457 = vmatpush1.msra.mxu0 0.0
    %1458 = vmatprep.subr.mxu0 0.0
    %1459 = vmatpush1.msra.mxu0 0.0
    %1460 = vmatprep.subr.mxu0 0.0
    %1461 = vmatpush1.msra.mxu0 0.0
    %1462 = vmatprep.subr.mxu0 0.0
    %1463 = vmatpush1.msra.mxu0 0.0
    %1464 = vmatprep.mubr.f32.mxu0 0.0
    %v1465 = vand.u32 %v1059, 4294901760
    %1466 = vmatmul.mubr.f32.gmra.mrb[0].mxu0 %v1465
    %v1467 = vpop.f32.mrb[0].mxu0
    %v1468 = vadd.f32 %v1385, %v1467
    %v1469 = vpop.f32.mrb[0].mxu0
    %1470 = vdwg.mxu0
    %1471 = vmatprep.subr.mxu0 0.0
    %v1472 = vand.u32 %v1047, 4294901760
    %1473 = vmatpush1.msra.mxu0 %v1472
    %1474 = vmatprep.subr.mxu0 0.0
    %v1475 = vand.u32 %v1048, 4294901760
    %1476 = vmatpush1.msra.mxu0 %v1475
    %1477 = vmatprep.subr.mxu0 0.0
    %v1478 = vand.u32 %v1049, 4294901760
    %1479 = vmatpush1.msra.mxu0 %v1478
    %1480 = vmatprep.subr.mxu0 0.0
    %v1481 = vand.u32 %v1050, 4294901760
    %1482 = vmatpush1.msra.mxu0 %v1481
    %1483 = vmatprep.subr.mxu0 0.0
    %1484 = vmatpush1.msra.mxu0 0.0
    %1485 = vmatprep.subr.mxu0 0.0
    %1486 = vmatpush1.msra.mxu0 0.0
    %1487 = vmatprep.subr.mxu0 0.0
    %1488 = vmatpush1.msra.mxu0 0.0
    %1489 = vmatprep.subr.mxu0 0.0
    %1490 = vmatpush1.msra.mxu0 0.0
    %1491 = vmatprep.subr.mxu0 0.0
    %1492 = vmatpush1.msra.mxu0 0.0
    %1493 = vmatprep.subr.mxu0 0.0
    %1494 = vmatpush1.msra.mxu0 0.0
    %1495 = vmatprep.subr.mxu0 0.0
    %1496 = vmatpush1.msra.mxu0 0.0
    %1497 = vmatprep.subr.mxu0 0.0
    %1498 = vmatpush1.msra.mxu0 0.0
    %1499 = vmatprep.subr.mxu0 0.0
    %1500 = vmatpush1.msra.mxu0 0.0
    %1501 = vmatprep.subr.mxu0 0.0
    %1502 = vmatpush1.msra.mxu0 0.0
    %1503 = vmatprep.subr.mxu0 0.0
    %1504 = vmatpush1.msra.mxu0 0.0
    %1505 = vmatprep.subr.mxu0 0.0
    %1506 = vmatpush1.msra.mxu0 0.0
    %1507 = vmatprep.subr.mxu0 0.0
    %1508 = vmatpush1.msra.mxu0 0.0
    %1509 = vmatprep.subr.mxu0 0.0
    %1510 = vmatpush1.msra.mxu0 0.0
    %1511 = vmatprep.subr.mxu0 0.0
    %1512 = vmatpush1.msra.mxu0 0.0
    %1513 = vmatprep.subr.mxu0 0.0
    %1514 = vmatpush1.msra.mxu0 0.0
    %1515 = vmatprep.subr.mxu0 0.0
    %1516 = vmatpush1.msra.mxu0 0.0
    %1517 = vmatprep.subr.mxu0 0.0
    %1518 = vmatpush1.msra.mxu0 0.0
    %1519 = vmatprep.subr.mxu0 0.0
    %1520 = vmatpush1.msra.mxu0 0.0
    %1521 = vmatprep.subr.mxu0 0.0
    %1522 = vmatpush1.msra.mxu0 0.0
    %1523 = vmatprep.subr.mxu0 0.0
    %1524 = vmatpush1.msra.mxu0 0.0
    %1525 = vmatprep.subr.mxu0 0.0
    %1526 = vmatpush1.msra.mxu0 0.0
    %1527 = vmatprep.subr.mxu0 0.0
    %1528 = vmatpush1.msra.mxu0 0.0
    %1529 = vmatprep.subr.mxu0 0.0
    %1530 = vmatpush1.msra.mxu0 0.0
    %1531 = vmatprep.subr.mxu0 0.0
    %1532 = vmatpush1.msra.mxu0 0.0
    %1533 = vmatprep.subr.mxu0 0.0
    %1534 = vmatpush1.msra.mxu0 0.0
    %1535 = vmatprep.subr.mxu0 0.0
    %1536 = vmatpush1.msra.mxu0 0.0
    %1537 = vmatprep.subr.mxu0 0.0
    %1538 = vmatpush1.msra.mxu0 0.0
    %1539 = vmatprep.mubr.f32.mxu0 0.0
    %v1540 = vand.u32 %v1059, 4294901760
    %1541 = vmatmul.mubr.f32.gmra.mrb[0].mxu0 %v1540
    %v1542 = vpop.f32.mrb[0].mxu0
    %v1543 = vadd.f32 %v1468, %v1542
    %v1544 = vpop.f32.mrb[0].mxu0
    %1545 = vdwg.mxu0
    %1547 = vrot.lane.b32.xlu0 %v1543, 96
    %v1548 = vpop.permute.xlu0 %1547
    %1550 = vrot.lane.b32.xlu0 %v1543, 64
    %v1551 = vpop.permute.xlu0 %1550
    %1553 = vrot.lane.b32.xlu0 %v1543, 32
    %v1554 = vpop.permute.xlu0 %1553
    %v1556 = vcombine.low %v1543, %v1551
    %v1557 = vcombine.high %v1543, %v1551
    %v1559 = vunpack.c.l.s4 1983009808
    %v1560 = vunpack.c.0.s8 %v1559
    %v1561 = vlaneseq
    %v1562 = vshrl.u32 %v1561, 7
    %v1563 = vsub.s32 %v1560, %v1562
    %v1564 = vrot.slane %v1556, %v1563
    %v1566 = vunpack.c.l.s4 1983009808
    %v1567 = vunpack.c.0.s8 %v1566
    %v1568 = vlaneseq
    %v1569 = vshrl.u32 %v1568, 7
    %v1570 = vsub.s32 %v1567, %v1569
    %v1571 = vrot.slane %v1557, %v1570
    %v1572 = vcombine.low %v1548, %v1554
    %v1573 = vcombine.high %v1548, %v1554
    %v1575 = vunpack.c.l.s4 1983009808
    %v1576 = vunpack.c.0.s8 %v1575
    %v1577 = vlaneseq
    %v1578 = vshrl.u32 %v1577, 7
    %v1579 = vsub.s32 %v1576, %v1578
    %v1580 = vrot.slane %v1572, %v1579
    %v1582 = vunpack.c.l.s4 1983009808
    %v1583 = vunpack.c.0.s8 %v1582
    %v1584 = vlaneseq
    %v1585 = vshrl.u32 %v1584, 7
    %v1586 = vsub.s32 %v1583, %v1585
    %v1587 = vrot.slane %v1573, %v1586
    %v1588 = vcombine.low %v1564, %v1580
    %v1589 = vcombine.high %v1564, %v1580
    %v1591 = vunpack.c.l.s4 1934713408
    %v1592 = vunpack.c.0.s8 %v1591
    %v1593 = vlaneseq
    %v1594 = vshrl.u32 %v1593, 7
    %v1595 = vsub.s32 %v1592, %v1594
    %v1596 = vrot.slane %v1588, %v1595
    %v1598 = vunpack.c.l.s4 1934713408
    %v1599 = vunpack.c.0.s8 %v1598
    %v1600 = vlaneseq
    %v1601 = vshrl.u32 %v1600, 7
    %v1602 = vsub.s32 %v1599, %v1601
    %v1603 = vrot.slane %v1589, %v1602
    %v1604 = vcombine.low %v1571, %v1587
    %v1605 = vcombine.high %v1571, %v1587
    %v1607 = vunpack.c.l.s4 1934713408
    %v1608 = vunpack.c.0.s8 %v1607
    %v1609 = vlaneseq
    %v1610 = vshrl.u32 %v1609, 7
    %v1611 = vsub.s32 %v1608, %v1610
    %v1612 = vrot.slane %v1604, %v1611
    %v1614 = vunpack.c.l.s4 1934713408
    %v1615 = vunpack.c.0.s8 %v1614
    %v1616 = vlaneseq
    %v1617 = vshrl.u32 %v1616, 7
    %v1618 = vsub.s32 %v1615, %v1617
    %v1619 = vrot.slane %v1605, %v1618
    %v1620 = vcombine.high %v1596, 0.0
    %v1621 = vcombine.high %v1603, 0.0
    %v1622 = vcombine.high %v1612, 0.0
    %v1623 = vcombine.high %v1619, 0.0
    %vm1624 = vcmask 257024
    %v1625 = vsel %vm1624, %v1596, -inf
    %1626 = vmax.xlane.f32.xlu0 %v1625
    %v1627 = vpop.xlane.xlu0 %1626
    %v1628 = vsel %vm1624, %v1620, -inf
    %1629 = vmax.xlane.f32.xlu0 %v1628
    %v1630 = vpop.xlane.xlu0 %1629
    %v1631 = vsel %vm1624, %v1603, -inf
    %1632 = vmax.xlane.f32.xlu0 %v1631
    %v1633 = vpop.xlane.xlu0 %1632
    %v1634 = vsel %vm1624, %v1621, -inf
    %1635 = vmax.xlane.f32.xlu0 %v1634
    %v1636 = vpop.xlane.xlu0 %1635
    %v1637 = vsel %vm1624, %v1612, -inf
    %1638 = vmax.xlane.f32.xlu0 %v1637
    %v1639 = vpop.xlane.xlu0 %1638
    %v1640 = vsel %vm1624, %v1622, -inf
    %1641 = vmax.xlane.f32.xlu0 %v1640
    %v1642 = vpop.xlane.xlu0 %1641
    %v1643 = vsel %vm1624, %v1619, -inf
    %1644 = vmax.xlane.f32.xlu0 %v1643
    %v1645 = vpop.xlane.xlu0 %1644
    %v1646 = vsel %vm1624, %v1623, -inf
    %1647 = vmax.xlane.f32.xlu0 %v1646
    %v1648 = vpop.xlane.xlu0 %1647
    %v1649 = vsub.f32 %v1596, %v1627
    %v1650 = vsub.f32 %v1620, %v1630
    %v1651 = vsub.f32 %v1603, %v1633
    %v1652 = vsub.f32 %v1621, %v1636
    %v1653 = vsub.f32 %v1612, %v1639
    %v1654 = vsub.f32 %v1622, %v1642
    %v1655 = vsub.f32 %v1619, %v1645
    %v1656 = vsub.f32 %v1623, %v1648
    %v1657 = vmul.f32 %v1649, 1.442695
    %v1658 = vpow.pop %v1657
    %v1659 = vmul.f32 %v1650, 1.442695
    %v1660 = vpow.pop %v1659
    %v1661 = vmul.f32 %v1651, 1.442695
    %v1662 = vpow.pop %v1661
    %v1663 = vmul.f32 %v1652, 1.442695
    %v1664 = vpow.pop %v1663
    %v1665 = vmul.f32 %v1653, 1.442695
    %v1666 = vpow.pop %v1665
    %v1667 = vmul.f32 %v1654, 1.442695
    %v1668 = vpow.pop %v1667
    %v1669 = vmul.f32 %v1655, 1.442695
    %v1670 = vpow.pop %v1669
    %v1671 = vmul.f32 %v1656, 1.442695
    %v1672 = vpow.pop %v1671
    %v1673 = vsel %vm1624, %v1658, 0.0
    %1674 = vadd.xlane.f32.xlu0 %v1673
    %v1675 = vpop.xlane.xlu0 %1674
    %v1676 = vsel %vm1624, %v1660, 0.0
    %1677 = vadd.xlane.f32.xlu0 %v1676
    %v1678 = vpop.xlane.xlu0 %1677
    %v1679 = vsel %vm1624, %v1662, 0.0
    %1680 = vadd.xlane.f32.xlu0 %v1679
    %v1681 = vpop.xlane.xlu0 %1680
    %v1682 = vsel %vm1624, %v1664, 0.0
    %1683 = vadd.xlane.f32.xlu0 %v1682
    %v1684 = vpop.xlane.xlu0 %1683
    %v1685 = vsel %vm1624, %v1666, 0.0
    %1686 = vadd.xlane.f32.xlu0 %v1685
    %v1687 = vpop.xlane.xlu0 %1686
    %v1688 = vsel %vm1624, %v1668, 0.0
    %1689 = vadd.xlane.f32.xlu0 %v1688
    %v1690 = vpop.xlane.xlu0 %1689
    %v1691 = vsel %vm1624, %v1670, 0.0
    %1692 = vadd.xlane.f32.xlu0 %v1691
    %v1693 = vpop.xlane.xlu0 %1692
    %v1694 = vsel %vm1624, %v1672, 0.0
    %1695 = vadd.xlane.f32.xlu0 %v1694
    %v1696 = vpop.xlane.xlu0 %1695
    %v1697 = vrcp.pop %v1675
    %v1698 = vmul.f32 %v1658, %v1697
    %v1699 = vrcp.pop %v1678
    %v1700 = vmul.f32 %v1660, %v1699
    %v1701 = vrcp.pop %v1681
    %v1702 = vmul.f32 %v1662, %v1701
    %v1703 = vrcp.pop %v1684
    %v1704 = vmul.f32 %v1664, %v1703
    %v1705 = vrcp.pop %v1687
    %v1706 = vmul.f32 %v1666, %v1705
    %v1707 = vrcp.pop %v1690
    %v1708 = vmul.f32 %v1668, %v1707
    %v1709 = vrcp.pop %v1693
    %v1710 = vmul.f32 %v1670, %v1709
    %v1711 = vrcp.pop %v1696
    %v1712 = vmul.f32 %v1672, %v1711
    %v1713 = vcombine.low %v1698, %v1702
    %v1715 = vunpack.c.l.s4 1983009808
    %v1716 = vunpack.c.0.s8 %v1715
    %v1717 = vlaneseq
    %v1718 = vshrl.u32 %v1717, 7
    %v1719 = vsub.s32 %v1716, %v1718
    %v1720 = vrot.slane %v1713, %v1719
    %v1721 = vcombine.low %v1700, %v1704
    %v1723 = vunpack.c.l.s4 1983009808
    %v1724 = vunpack.c.0.s8 %v1723
    %v1725 = vlaneseq
    %v1726 = vshrl.u32 %v1725, 7
    %v1727 = vsub.s32 %v1724, %v1726
    %v1728 = vrot.slane %v1721, %v1727
    %v1729 = vcombine.low %v1706, %v1710
    %v1731 = vunpack.c.l.s4 1983009808
    %v1732 = vunpack.c.0.s8 %v1731
    %v1733 = vlaneseq
    %v1734 = vshrl.u32 %v1733, 7
    %v1735 = vsub.s32 %v1732, %v1734
    %v1736 = vrot.slane %v1729, %v1735
    %v1737 = vcombine.low %v1708, %v1712
    %v1739 = vunpack.c.l.s4 1983009808
    %v1740 = vunpack.c.0.s8 %v1739
    %v1741 = vlaneseq
    %v1742 = vshrl.u32 %v1741, 7
    %v1743 = vsub.s32 %v1740, %v1742
    %v1744 = vrot.slane %v1737, %v1743
    %v1745 = vcombine.low %v1720, %v1728
    %v1746 = vcombine.high %v1720, %v1728
    %v1748 = vunpack.c.l.s4 1934713408
    %v1749 = vunpack.c.0.s8 %v1748
    %v1750 = vlaneseq
    %v1751 = vshrl.u32 %v1750, 7
    %v1752 = vsub.s32 %v1749, %v1751
    %v1753 = vrot.slane %v1745, %v1752
    %v1755 = vunpack.c.l.s4 1934713408
    %v1756 = vunpack.c.0.s8 %v1755
    %v1757 = vlaneseq
    %v1758 = vshrl.u32 %v1757, 7
    %v1759 = vsub.s32 %v1756, %v1758
    %v1760 = vrot.slane %v1746, %v1759
    %v1761 = vcombine.low %v1736, %v1744
    %v1762 = vcombine.high %v1736, %v1744
    %v1764 = vunpack.c.l.s4 1934713408
    %v1765 = vunpack.c.0.s8 %v1764
    %v1766 = vlaneseq
    %v1767 = vshrl.u32 %v1766, 7
    %v1768 = vsub.s32 %v1765, %v1767
    %v1769 = vrot.slane %v1761, %v1768
    %v1771 = vunpack.c.l.s4 1934713408
    %v1772 = vunpack.c.0.s8 %v1771
    %v1773 = vlaneseq
    %v1774 = vshrl.u32 %v1773, 7
    %v1775 = vsub.s32 %v1772, %v1774
    %v1776 = vrot.slane %v1762, %v1775
    %v1777 = vcombine.low %v1753, %v1769
    %v1778 = vcombine.high %v1753, %v1769
    %v1779 = vcombine.low %v1760, %v1776
    %v1780 = vcombine.high %v1760, %v1776
    %1782 = vrot.lane.b32.xlu0 %v1778, 32
    %v1783 = vpop.permute.xlu0 %1782
    %1786 = vrot.lane.b32.xlu0 %v1779, 64
    %v1787 = vpop.permute.xlu0 %1786
    %1790 = vrot.lane.b32.xlu0 %v1780, 96
    %v1791 = vpop.permute.xlu0 %1790
    %v1793 = vsel %vm557, %v1777, %v1783
    %vm1794 = vcmask 523264
    %v1795 = vsel %vm1794, %v1793, %v1787
    %vm1796 = vcmask 785408
    %v1797 = vsel %vm1796, %v1795, %v1791
    %1798 = vst [vmem:[%s6] sm:$0xff] %v1797
    // Predicated region
    $region42: #{actor_forward.1} parent=1 // pred_check
      _
    $region43: #{actor_forward.1} parent=1 // pred_check_branch
      %1800 = sbr.rel (0) target = $region45
    $region44: #{actor_forward.1} parent=1 // pred_region
      _
    $region45: #{actor_forward.1} parent=1 // pred_fallthru
      _
    // Predicated region
    $region46: #{actor_forward.1} parent=1 // pred_check
      _
    $region47: #{actor_forward.1} parent=1 // pred_check_branch
      %1802 = sbr.rel (0) target = $region49
    $region48: #{actor_forward.1} parent=1 // pred_region
      _
    $region49: #{actor_forward.1} parent=1 // pred_fallthru
      _
    %1803 = vsyncpa [#allocation3], 1
    %1804 = vsyncpa [#allocation5], 1
    %1805 = vsyncpa [#allocation8], 1

</llo_original>
